<compile_context>
chip_gen: v5e
topology: v5e:2x2
jax: 0.10.0
libtpu: 0.0.40
codegen_flags: <defaults>
</compile_context>

<pallas_src>
import jax
import jax.numpy as jnp
import numpy as np
from jax import lax
from jax.experimental import pallas as pl
from jax.experimental.pallas import tpu as pltpu

# Small, self-consistent hyper-parameters (original uses seq_len=224, here shrunk).
SEQ_LEN = 16            # module class attr seq_len
LSTM_HIDDEN = 8         # lstm_hidden_units
INTERMEDIATE = 16       # intermediate_features (fixed in the module)
SUB_BATCHES = 8
BATCHES = 2
N_FEATURES = 1
MAX_ROWS_PER_STEP = 512  # max sequences per grid step in kernel 1 before row tiling kicks in


def _sigmoid(x):
    return 1.0 / (1.0 + jnp.exp(-x))


# ---------------- Kernel 1: breath-level LSTM (nn.LSTM(1, H1, batch_first=True)) ------
# xp_ref : (tile_n, T*4*H1)  pre-projected inputs x*W_ih + b, lane-dense, per-step gate
#                            slab at columns [t*4*H1, (t+1)*4*H1), gate order [i, f, o, g]
# whh_ref: (H1, 4*H1)        recurrent weight (transposed), gate order [i, f, o, g]
# out_ref: (tile_n, T*H1)    all hidden states, lane-dense (feature index = t*H1 + h)
def lstm_breath_kernel(xp_ref, whh_ref, out_ref):
    n = xp_ref.shape[0]
    H = whh_ref.shape[0]
    G = 4 * H
    T = xp_ref.shape[1] // G
    w_hh = whh_ref[...]                               # hoist weight load out of the loop

    h = jnp.zeros((n, H), jnp.float32)
    c = jnp.zeros((n, H), jnp.float32)
    for t in range(T):                                # static full unroll (T small, fixed)
        # static lane slice of the pre-projected gates; off the serial h-dependency chain
        gates = xp_ref[:, t * G:(t + 1) * G] + jnp.dot(
            h, w_hh, preferred_element_type=jnp.float32)          # (n, 4H)
        sig = _sigmoid(gates[:, : 3 * H])             # one sigmoid pass over [i|f|o]
        g_g = jnp.tanh(gates[:, 3 * H:])              # one tanh pass over [g]
        i_g = sig[:, :H]
        f_g = sig[:, H: 2 * H]
        o_g = sig[:, 2 * H: 3 * H]
        c = f_g * c + i_g * g_g
        h = o_g * jnp.tanh(c)
        out_ref[:, t * H:(t + 1) * H] = h             # static lane-aligned slice store


# ---------------- Kernel 2: batch-level LSTM (nn.LSTM(H1*T, 16)) + final Linear --------
# The second nn.LSTM has batch_first=False, so it recurs over the `batches` axis with the
# S sub-batches as independent batch elements.  The S states are kept as one flat
# (1, S*H2) row and the recurrence uses a block-diagonal weight: this makes the final
# Linear a single matmul on the already-flat hidden states (no in-kernel reshape/slicing).
# xp_ref  : (B, 4*S*H2)    hoisted input projection + biases, columns laid out [gate, s, h]
# whh_ref : (S*H2, 4*S*H2) block-diagonal recurrent weight in the same column layout
# wfin_ref: (S*H2, 2), bfin_ref: (1, 2), out_ref: (B, 2)
def lstm_batch_linear_kernel(xp_ref, whh_ref, wfin_ref, bfin_ref, out_ref):
    B = xp_ref.shape[0]
    SH = whh_ref.shape[0]                             # S * H2
    G3 = 3 * SH
    w_hh = whh_ref[...]

    h = jnp.zeros((1, SH), jnp.float32)
    c = jnp.zeros((1, SH), jnp.float32)
    hs = []
    for b in range(B):                                # static unroll over the tiny seq axis
        gates = xp_ref[b:b + 1, :] + jnp.dot(h, w_hh, preferred_element_type=jnp.float32)
        sig = _sigmoid(gates[:, :G3])                 # [i | f | o]
        g_g = jnp.tanh(gates[:, G3:])                 # [g]
        i_g = sig[:, :SH]
        f_g = sig[:, SH: 2 * SH]
        o_g = sig[:, 2 * SH: G3]
        c = f_g * c + i_g * g_g
        h = o_g * jnp.tanh(c)
        hs.append(h)
    # linear_final on outputs.view([batches, -1]): h is already the flat (s, h) row,
    # so the whole Linear is ONE (B, S*H2) @ (S*H2, 2) matmul.
    h_all = jnp.concatenate(hs, axis=0)               # (B, S*H2)
    out_ref[...] = bfin_ref[...] + jnp.dot(h_all, wfin_ref[...],
                                           preferred_element_type=jnp.float32)


# ------------------------------ parameter init ----------------------------------------
def init_params(key):
    H1, H2 = LSTM_HIDDEN, INTERMEDIATE
    D2 = H1 * SEQ_LEN
    s1 = 1.0 / np.sqrt(H1)
    s2 = 1.0 / np.sqrt(H2)
    sf = 1.0 / np.sqrt(H2 * SUB_BATCHES)
    ks = jax.random.split(key, 10)
    u = lambda k, shape, s: jax.random.uniform(k, shape, jnp.float32, -s, s)
    return dict(
        w_ih1=u(ks[0], (4 * H1, 1), s1),              # lstm_breath_block
        w_hh1=u(ks[1], (4 * H1, H1), s1),
        b_ih1=u(ks[2], (4 * H1,), s1),
        b_hh1=u(ks[3], (4 * H1,), s1),
        w_ih2=u(ks[4], (4 * H2, D2), s2),             # lstm_batch_block
        w_hh2=u(ks[5], (4 * H2, H2), s2),
        b_ih2=u(ks[6], (4 * H2,), s2),
        b_hh2=u(ks[7], (4 * H2,), s2),
        w_fin=u(ks[8], (2, H2 * SUB_BATCHES), sf),    # linear_final
        b_fin=u(ks[9], (2,), sf),
    )


def _reorder_ifgo_to_ifog(w, H):
    # PyTorch packs LSTM gate blocks as [i, f, g, o] along axis 0; kernels use [i, f, o, g]
    # so one sigmoid pass covers the first 3 blocks and one tanh pass the last block.
    return jnp.concatenate([w[: 2 * H], w[3 * H:], w[2 * H: 3 * H]], axis=0)


def _pick_row_tile(N):
    # All rows in one grid step when they fit comfortably (shortest serial chain on
    # single-TC chips); otherwise multiple-of-8 row tiles gridded as "parallel".
    if N <= MAX_ROWS_PER_STEP or N % 8 != 0:
        return N
    tile_n = MAX_ROWS_PER_STEP
    while N % tile_n != 0:
        tile_n -= 8
    return tile_n


# ------------------------------ forward wrapper ----------------------------------------
@jax.jit
def double_lstm_forward(x, params):
    B, S, F, T = x.shape
    H1, H2 = LSTM_HIDDEN, INTERMEDIATE
    N = B * S
    D2 = T * H1
    G1 = 4 * H1

    # ---- breath LSTM: hoist the (input size 1) projection + biases off the recurrence --
    # torch: x.reshape([B, S, T, F]) with F == 1; every batch runs the same LSTM with
    # zero initial state, so all B*S sequences are processed together.
    x2 = x.reshape(N, T).astype(jnp.float32)                       # (N, T), row n = b*S+s
    w_ih1 = _reorder_ifgo_to_ifog(params["w_ih1"], H1)             # (4H1, 1)
    w_hh1 = _reorder_ifgo_to_ifog(params["w_hh1"], H1)             # (4H1, H1)
    b1 = _reorder_ifgo_to_ifog(params["b_ih1"] + params["b_hh1"], H1)
    # lane-dense pre-projected gates: column t*4H1 + (gate*H1 + h); no transpose needed.
    xp1 = (x2[:, :, None] * w_ih1[:, 0][None, None, :] + b1).reshape(N, T * G1)
    whh1_t = w_hh1.T                                               # (H1, 4H1)

    tile_n = _pick_row_tile(N)
    seq1 = pl.pallas_call(
        lstm_breath_kernel,
        out_shape=jax.ShapeDtypeStruct((N, D2), jnp.float32),
        grid=(N // tile_n,),
        in_specs=[
            pl.BlockSpec((tile_n, T * G1), lambda i: (i, 0)),
            pl.BlockSpec((H1, G1), lambda i: (0, 0)),
        ],
        out_specs=pl.BlockSpec((tile_n, D2), lambda i: (i, 0)),
        compiler_params=pltpu.CompilerParams(dimension_semantics=("parallel",)),
    )(xp1, whh1_t)                                                 # (N, T*H1), lane-dense

    # glue: outputs.view([batches, sub_batches, -1]) is now a pure reshape (no transpose).
    z = seq1.reshape(B, S, D2)

    # ---- batch LSTM: hoist the (B*S, D2) @ (D2, 4H2) input projection off the chain ----
    w_ih2 = _reorder_ifgo_to_ifog(params["w_ih2"], H2)             # (4H2, D2)
    w_hh2 = _reorder_ifgo_to_ifog(params["w_hh2"], H2)             # (4H2, H2)
    b2 = _reorder_ifgo_to_ifog(params["b_ih2"] + params["b_hh2"], H2)
    xp2 = jnp.einsum("bsd,gd->bsg", z, w_ih2) + b2                 # (B, S, 4H2)
    # flatten to the in-kernel [gate, s, h] column layout
    xp2 = xp2.reshape(B, S, 4, H2).transpose(0, 2, 1, 3).reshape(B, 4 * S * H2)

    # block-diagonal recurrent weight: flat (S*H2) state -> flat (4*S*H2) gates.
    # (the S sub-batches are independent LSTM batch elements, so this is exact.)
    blocks = w_hh2.reshape(4, H2, H2)                              # [gate, h_out, h_in]
    whh_big = jnp.einsum("st,goi->sigto", jnp.eye(S, dtype=jnp.float32),
                         blocks).reshape(S * H2, 4 * S * H2)

    wfin_t = params["w_fin"].T                                     # (S*H2, 2)
    bfin = params["b_fin"].reshape(1, 2)

    vmem = pl.BlockSpec(memory_space=pltpu.MemorySpace.VMEM)
    out = pl.pallas_call(
        lstm_batch_linear_kernel,
        out_shape=jax.ShapeDtypeStruct((B, 2), jnp.float32),
        in_specs=[vmem] * 4,
        out_specs=vmem,
    )(xp2, whh_big, wfin_t, bfin)                                  # (B, 2)
    return out


# ------------------------------ pure-JAX reference -------------------------------------
def _lstm_ref(x_seq, w_ih, w_hh, b_ih, b_hh):
    # x_seq: (T, N, D) -> all hidden states (T, N, H); PyTorch gate order [i, f, g, o].
    H = w_hh.shape[1]

    def cell(carry, x_t):
        h, c = carry
        gates = x_t @ w_ih.T + h @ w_hh.T + b_ih + b_hh
        i, f, g, o = jnp.split(gates, 4, axis=-1)
        c = jax.nn.sigmoid(f) * c + jax.nn.sigmoid(i) * jnp.tanh(g)
        h = jax.nn.sigmoid(o) * jnp.tanh(c)
        return (h, c), h

    N = x_seq.shape[1]
    init = (jnp.zeros((N, H), jnp.float32), jnp.zeros((N, H), jnp.float32))
    _, hs = lax.scan(cell, init, x_seq)
    return hs


def reference_forward(x, params):
    B, S, F, T = x.shape
    H1, H2 = LSTM_HIDDEN, INTERMEDIATE
    N = B * S
    x_tm = jnp.transpose(x.reshape(B, S, T, F).reshape(N, T, F), (1, 0, 2))
    hs1 = _lstm_ref(x_tm, params["w_ih1"], params["w_hh1"], params["b_ih1"], params["b_hh1"])
    z = jnp.transpose(hs1, (1, 0, 2)).reshape(B, S, T * H1)
    hs2 = _lstm_ref(z, params["w_ih2"], params["w_hh2"], params["b_ih2"], params["b_hh2"])
    flat = hs2.reshape(B, S * H2)
    return flat @ params["w_fin"].T + params["b_fin"]


if __name__ == "__main__":
    key = jax.random.PRNGKey(0)
    kx, kp = jax.random.split(key)
    x = jax.random.normal(kx, (BATCHES, SUB_BATCHES, N_FEATURES, SEQ_LEN), jnp.float32)
    metadata = None  # unused by the original forward()
    params = init_params(kp)

    out = double_lstm_forward(x, params)
    out = jax.block_until_ready(out)
    assert out.shape == (BATCHES, 2)

    ref = reference_forward(x, params)
    if not np.allclose(np.asarray(out), np.asarray(ref), rtol=2e-3, atol=2e-3):
        raise SystemExit(
            f"mismatch: max|diff|={np.max(np.abs(np.asarray(out) - np.asarray(ref)))}")
    print("KERNEL_OK")
</pallas_src>

<mosaic_0001>
module attributes {stable_mosaic.version = 11 : i64} {
  func.func @lstm_breath_kernel(%arg0: i32, %arg1: memref<16x512xf32, #tpu.memory_space<vmem>>, %arg2: memref<8x32xf32, #tpu.memory_space<vmem>>, %arg3: memref<16x128xf32, #tpu.memory_space<vmem>>) attributes {dimension_semantics = [#tpu.dimension_semantics<parallel>], iteration_bounds = array<i64: 1>, scalar_prefetch = 0 : i64, scratch_operands = 0 : i64, tpu.core_type = #tpu.core_type<tc>, window_params = [{transform_indices = @transform_0, window_bounds = array<i64: 16, 512>}, {pipeline_mode = #tpu.pipeline_mode<synchronous>, transform_indices = @transform_1, window_bounds = array<i64: 8, 32>}, {transform_indices = @transform_2, window_bounds = array<i64: 16, 128>}]} {
    %c0 = arith.constant 0 : index
    %c0_0 = arith.constant 0 : index
    %0 = vector.load %arg2[%c0, %c0_0] : memref<8x32xf32, #tpu.memory_space<vmem>>, vector<8x32xf32>
    %cst = arith.constant 0.000000e+00 : f32
    %1 = vector.broadcast %cst : f32 to vector<16x8xf32>
    %cst_1 = arith.constant 0.000000e+00 : f32
    %2 = vector.broadcast %cst_1 : f32 to vector<16x8xf32>
    %c0_2 = arith.constant 0 : index
    %c0_3 = arith.constant 0 : index
    %3 = vector.load %arg1[%c0_2, %c0_3] : memref<16x512xf32, #tpu.memory_space<vmem>>, vector<16x32xf32>
    %cst_4 = arith.constant dense<0.000000e+00> : vector<16x32xf32>
    %4 = tpu.matmul %1, %0, %cst_4 {dimension_numbers = #tpu.dot_dimension_numbers<[1], [0], [0], [1], [0, 0, 1, 1], [], []>} : vector<16x8xf32>, vector<8x32xf32>, vector<16x32xf32> -> vector<16x32xf32>
    %5 = arith.addf %3, %4 : vector<16x32xf32>
    %6 = vector.extract_strided_slice %5 {offsets = [0, 0], sizes = [16, 24], strides = [1, 1]} : vector<16x32xf32> to vector<16x24xf32>
    %cst_5 = arith.constant 0.000000e+00 : f32
    %7 = vector.broadcast %cst_5 : f32 to vector<16x24xf32>
    %8 = arith.subf %7, %6 : vector<16x24xf32>
    %9 = math.exp %8 : vector<16x24xf32>
    %cst_6 = arith.constant 1.000000e+00 : f32
    %10 = vector.broadcast %cst_6 : f32 to vector<16x24xf32>
    %11 = arith.addf %10, %9 : vector<16x24xf32>
    %cst_7 = arith.constant 1.000000e+00 : f32
    %12 = vector.broadcast %cst_7 : f32 to vector<16x24xf32>
    %13 = arith.divf %12, %11 : vector<16x24xf32>
    %14 = vector.extract_strided_slice %5 {offsets = [0, 24], sizes = [16, 8], strides = [1, 1]} : vector<16x32xf32> to vector<16x8xf32>
    %15 = math.tanh %14 : vector<16x8xf32>
    %16 = vector.extract_strided_slice %13 {offsets = [0, 0], sizes = [16, 8], strides = [1, 1]} : vector<16x24xf32> to vector<16x8xf32>
    %17 = vector.extract_strided_slice %13 {offsets = [0, 8], sizes = [16, 8], strides = [1, 1]} : vector<16x24xf32> to vector<16x8xf32>
    %18 = vector.extract_strided_slice %13 {offsets = [0, 16], sizes = [16, 8], strides = [1, 1]} : vector<16x24xf32> to vector<16x8xf32>
    %19 = arith.mulf %17, %2 : vector<16x8xf32>
    %20 = arith.mulf %16, %15 : vector<16x8xf32>
    %21 = arith.addf %19, %20 : vector<16x8xf32>
    %22 = math.tanh %21 : vector<16x8xf32>
    %23 = arith.mulf %18, %22 : vector<16x8xf32>
    %c0_8 = arith.constant 0 : index
    %c0_9 = arith.constant 0 : index
    %24 = vector.load %arg3[%c0_8, %c0_9] : memref<16x128xf32, #tpu.memory_space<vmem>>, vector<16x8xf32>
    tpu.vector_store %arg3[%c0_8, %c0_9], %23 {strides = array<i32>} : memref<16x128xf32, #tpu.memory_space<vmem>>, vector<16x8xf32>,
    %c0_10 = arith.constant 0 : index
    %c32 = arith.constant 32 : index
    %25 = vector.load %arg1[%c0_10, %c32] : memref<16x512xf32, #tpu.memory_space<vmem>>, vector<16x32xf32>
    %cst_11 = arith.constant dense<0.000000e+00> : vector<16x32xf32>
    %26 = tpu.matmul %23, %0, %cst_11 {dimension_numbers = #tpu.dot_dimension_numbers<[1], [0], [0], [1], [0, 0, 1, 1], [], []>} : vector<16x8xf32>, vector<8x32xf32>, vector<16x32xf32> -> vector<16x32xf32>
    %27 = arith.addf %25, %26 : vector<16x32xf32>
    %28 = vector.extract_strided_slice %27 {offsets = [0, 0], sizes = [16, 24], strides = [1, 1]} : vector<16x32xf32> to vector<16x24xf32>
    %cst_12 = arith.constant 0.000000e+00 : f32
    %29 = vector.broadcast %cst_12 : f32 to vector<16x24xf32>
    %30 = arith.subf %29, %28 : vector<16x24xf32>
    %31 = math.exp %30 : vector<16x24xf32>
    %cst_13 = arith.constant 1.000000e+00 : f32
    %32 = vector.broadcast %cst_13 : f32 to vector<16x24xf32>
    %33 = arith.addf %32, %31 : vector<16x24xf32>
    %cst_14 = arith.constant 1.000000e+00 : f32
    %34 = vector.broadcast %cst_14 : f32 to vector<16x24xf32>
    %35 = arith.divf %34, %33 : vector<16x24xf32>
    %36 = vector.extract_strided_slice %27 {offsets = [0, 24], sizes = [16, 8], strides = [1, 1]} : vector<16x32xf32> to vector<16x8xf32>
    %37 = math.tanh %36 : vector<16x8xf32>
    %38 = vector.extract_strided_slice %35 {offsets = [0, 0], sizes = [16, 8], strides = [1, 1]} : vector<16x24xf32> to vector<16x8xf32>
    %39 = vector.extract_strided_slice %35 {offsets = [0, 8], sizes = [16, 8], strides = [1, 1]} : vector<16x24xf32> to vector<16x8xf32>
    %40 = vector.extract_strided_slice %35 {offsets = [0, 16], sizes = [16, 8], strides = [1, 1]} : vector<16x24xf32> to vector<16x8xf32>
    %41 = arith.mulf %39, %21 : vector<16x8xf32>
    %42 = arith.mulf %38, %37 : vector<16x8xf32>
    %43 = arith.addf %41, %42 : vector<16x8xf32>
    %44 = math.tanh %43 : vector<16x8xf32>
    %45 = arith.mulf %40, %44 : vector<16x8xf32>
    %c0_15 = arith.constant 0 : index
    %c8 = arith.constant 8 : index
    %46 = vector.load %arg3[%c0_15, %c8] : memref<16x128xf32, #tpu.memory_space<vmem>>, vector<16x8xf32>
    tpu.vector_store %arg3[%c0_15, %c8], %45 {strides = array<i32>} : memref<16x128xf32, #tpu.memory_space<vmem>>, vector<16x8xf32>,
    %c0_16 = arith.constant 0 : index
    %c64 = arith.constant 64 : index
    %47 = vector.load %arg1[%c0_16, %c64] : memref<16x512xf32, #tpu.memory_space<vmem>>, vector<16x32xf32>
    %cst_17 = arith.constant dense<0.000000e+00> : vector<16x32xf32>
    %48 = tpu.matmul %45, %0, %cst_17 {dimension_numbers = #tpu.dot_dimension_numbers<[1], [0], [0], [1], [0, 0, 1, 1], [], []>} : vector<16x8xf32>, vector<8x32xf32>, vector<16x32xf32> -> vector<16x32xf32>
    %49 = arith.addf %47, %48 : vector<16x32xf32>
    %50 = vector.extract_strided_slice %49 {offsets = [0, 0], sizes = [16, 24], strides = [1, 1]} : vector<16x32xf32> to vector<16x24xf32>
    %cst_18 = arith.constant 0.000000e+00 : f32
    %51 = vector.broadcast %cst_18 : f32 to vector<16x24xf32>
    %52 = arith.subf %51, %50 : vector<16x24xf32>
    %53 = math.exp %52 : vector<16x24xf32>
    %cst_19 = arith.constant 1.000000e+00 : f32
    %54 = vector.broadcast %cst_19 : f32 to vector<16x24xf32>
    %55 = arith.addf %54, %53 : vector<16x24xf32>
    %cst_20 = arith.constant 1.000000e+00 : f32
    %56 = vector.broadcast %cst_20 : f32 to vector<16x24xf32>
    %57 = arith.divf %56, %55 : vector<16x24xf32>
    %58 = vector.extract_strided_slice %49 {offsets = [0, 24], sizes = [16, 8], strides = [1, 1]} : vector<16x32xf32> to vector<16x8xf32>
    %59 = math.tanh %58 : vector<16x8xf32>
    %60 = vector.extract_strided_slice %57 {offsets = [0, 0], sizes = [16, 8], strides = [1, 1]} : vector<16x24xf32> to vector<16x8xf32>
    %61 = vector.extract_strided_slice %57 {offsets = [0, 8], sizes = [16, 8], strides = [1, 1]} : vector<16x24xf32> to vector<16x8xf32>
    %62 = vector.extract_strided_slice %57 {offsets = [0, 16], sizes = [16, 8], strides = [1, 1]} : vector<16x24xf32> to vector<16x8xf32>
    %63 = arith.mulf %61, %43 : vector<16x8xf32>
    %64 = arith.mulf %60, %59 : vector<16x8xf32>
    %65 = arith.addf %63, %64 : vector<16x8xf32>
    %66 = math.tanh %65 : vector<16x8xf32>
    %67 = arith.mulf %62, %66 : vector<16x8xf32>
    %c0_21 = arith.constant 0 : index
    %c16 = arith.constant 16 : index
    %68 = vector.load %arg3[%c0_21, %c16] : memref<16x128xf32, #tpu.memory_space<vmem>>, vector<16x8xf32>
    tpu.vector_store %arg3[%c0_21, %c16], %67 {strides = array<i32>} : memref<16x128xf32, #tpu.memory_space<vmem>>, vector<16x8xf32>,
    %c0_22 = arith.constant 0 : index
    %c96 = arith.constant 96 : index
    %69 = vector.load %arg1[%c0_22, %c96] : memref<16x512xf32, #tpu.memory_space<vmem>>, vector<16x32xf32>
    %cst_23 = arith.constant dense<0.000000e+00> : vector<16x32xf32>
    %70 = tpu.matmul %67, %0, %cst_23 {dimension_numbers = #tpu.dot_dimension_numbers<[1], [0], [0], [1], [0, 0, 1, 1], [], []>} : vector<16x8xf32>, vector<8x32xf32>, vector<16x32xf32> -> vector<16x32xf32>
    %71 = arith.addf %69, %70 : vector<16x32xf32>
    %72 = vector.extract_strided_slice %71 {offsets = [0, 0], sizes = [16, 24], strides = [1, 1]} : vector<16x32xf32> to vector<16x24xf32>
    %cst_24 = arith.constant 0.000000e+00 : f32
    %73 = vector.broadcast %cst_24 : f32 to vector<16x24xf32>
    %74 = arith.subf %73, %72 : vector<16x24xf32>
    %75 = math.exp %74 : vector<16x24xf32>
    %cst_25 = arith.constant 1.000000e+00 : f32
    %76 = vector.broadcast %cst_25 : f32 to vector<16x24xf32>
    %77 = arith.addf %76, %75 : vector<16x24xf32>
    %cst_26 = arith.constant 1.000000e+00 : f32
    %78 = vector.broadcast %cst_26 : f32 to vector<16x24xf32>
    %79 = arith.divf %78, %77 : vector<16x24xf32>
    %80 = vector.extract_strided_slice %71 {offsets = [0, 24], sizes = [16, 8], strides = [1, 1]} : vector<16x32xf32> to vector<16x8xf32>
    %81 = math.tanh %80 : vector<16x8xf32>
    %82 = vector.extract_strided_slice %79 {offsets = [0, 0], sizes = [16, 8], strides = [1, 1]} : vector<16x24xf32> to vector<16x8xf32>
    %83 = vector.extract_strided_slice %79 {offsets = [0, 8], sizes = [16, 8], strides = [1, 1]} : vector<16x24xf32> to vector<16x8xf32>
    %84 = vector.extract_strided_slice %79 {offsets = [0, 16], sizes = [16, 8], strides = [1, 1]} : vector<16x24xf32> to vector<16x8xf32>
    %85 = arith.mulf %83, %65 : vector<16x8xf32>
    %86 = arith.mulf %82, %81 : vector<16x8xf32>
    %87 = arith.addf %85, %86 : vector<16x8xf32>
    %88 = math.tanh %87 : vector<16x8xf32>
    %89 = arith.mulf %84, %88 : vector<16x8xf32>
    %c0_27 = arith.constant 0 : index
    %c24 = arith.constant 24 : index
    %90 = vector.load %arg3[%c0_27, %c24] : memref<16x128xf32, #tpu.memory_space<vmem>>, vector<16x8xf32>
    tpu.vector_store %arg3[%c0_27, %c24], %89 {strides = array<i32>} : memref<16x128xf32, #tpu.memory_space<vmem>>, vector<16x8xf32>,
    %c0_28 = arith.constant 0 : index
    %c128 = arith.constant 128 : index
    %91 = vector.load %arg1[%c0_28, %c128] : memref<16x512xf32, #tpu.memory_space<vmem>>, vector<16x32xf32>
    %cst_29 = arith.constant dense<0.000000e+00> : vector<16x32xf32>
    %92 = tpu.matmul %89, %0, %cst_29 {dimension_numbers = #tpu.dot_dimension_numbers<[1], [0], [0], [1], [0, 0, 1, 1], [], []>} : vector<16x8xf32>, vector<8x32xf32>, vector<16x32xf32> -> vector<16x32xf32>
    %93 = arith.addf %91, %92 : vector<16x32xf32>
    %94 = vector.extract_strided_slice %93 {offsets = [0, 0], sizes = [16, 24], strides = [1, 1]} : vector<16x32xf32> to vector<16x24xf32>
    %cst_30 = arith.constant 0.000000e+00 : f32
    %95 = vector.broadcast %cst_30 : f32 to vector<16x24xf32>
    %96 = arith.subf %95, %94 : vector<16x24xf32>
    %97 = math.exp %96 : vector<16x24xf32>
    %cst_31 = arith.constant 1.000000e+00 : f32
    %98 = vector.broadcast %cst_31 : f32 to vector<16x24xf32>
    %99 = arith.addf %98, %97 : vector<16x24xf32>
    %cst_32 = arith.constant 1.000000e+00 : f32
    %100 = vector.broadcast %cst_32 : f32 to vector<16x24xf32>
    %101 = arith.divf %100, %99 : vector<16x24xf32>
    %102 = vector.extract_strided_slice %93 {offsets = [0, 24], sizes = [16, 8], strides = [1, 1]} : vector<16x32xf32> to vector<16x8xf32>
    %103 = math.tanh %102 : vector<16x8xf32>
    %104 = vector.extract_strided_slice %101 {offsets = [0, 0], sizes = [16, 8], strides = [1, 1]} : vector<16x24xf32> to vector<16x8xf32>
    %105 = vector.extract_strided_slice %101 {offsets = [0, 8], sizes = [16, 8], strides = [1, 1]} : vector<16x24xf32> to vector<16x8xf32>
    %106 = vector.extract_strided_slice %101 {offsets = [0, 16], sizes = [16, 8], strides = [1, 1]} : vector<16x24xf32> to vector<16x8xf32>
    %107 = arith.mulf %105, %87 : vector<16x8xf32>
    %108 = arith.mulf %104, %103 : vector<16x8xf32>
    %109 = arith.addf %107, %108 : vector<16x8xf32>
    %110 = math.tanh %109 : vector<16x8xf32>
    %111 = arith.mulf %106, %110 : vector<16x8xf32>
    %c0_33 = arith.constant 0 : index
    %c32_34 = arith.constant 32 : index
    %112 = vector.load %arg3[%c0_33, %c32_34] : memref<16x128xf32, #tpu.memory_space<vmem>>, vector<16x8xf32>
    tpu.vector_store %arg3[%c0_33, %c32_34], %111 {strides = array<i32>} : memref<16x128xf32, #tpu.memory_space<vmem>>, vector<16x8xf32>,
    %c0_35 = arith.constant 0 : index
    %c160 = arith.constant 160 : index
    %113 = vector.load %arg1[%c0_35, %c160] : memref<16x512xf32, #tpu.memory_space<vmem>>, vector<16x32xf32>
    %cst_36 = arith.constant dense<0.000000e+00> : vector<16x32xf32>
    %114 = tpu.matmul %111, %0, %cst_36 {dimension_numbers = #tpu.dot_dimension_numbers<[1], [0], [0], [1], [0, 0, 1, 1], [], []>} : vector<16x8xf32>, vector<8x32xf32>, vector<16x32xf32> -> vector<16x32xf32>
    %115 = arith.addf %113, %114 : vector<16x32xf32>
    %116 = vector.extract_strided_slice %115 {offsets = [0, 0], sizes = [16, 24], strides = [1, 1]} : vector<16x32xf32> to vector<16x24xf32>
    %cst_37 = arith.constant 0.000000e+00 : f32
    %117 = vector.broadcast %cst_37 : f32 to vector<16x24xf32>
    %118 = arith.subf %117, %116 : vector<16x24xf32>
    %119 = math.exp %118 : vector<16x24xf32>
    %cst_38 = arith.constant 1.000000e+00 : f32
    %120 = vector.broadcast %cst_38 : f32 to vector<16x24xf32>
    %121 = arith.addf %120, %119 : vector<16x24xf32>
    %cst_39 = arith.constant 1.000000e+00 : f32
    %122 = vector.broadcast %cst_39 : f32 to vector<16x24xf32>
    %123 = arith.divf %122, %121 : vector<16x24xf32>
    %124 = vector.extract_strided_slice %115 {offsets = [0, 24], sizes = [16, 8], strides = [1, 1]} : vector<16x32xf32> to vector<16x8xf32>
    %125 = math.tanh %124 : vector<16x8xf32>
    %126 = vector.extract_strided_slice %123 {offsets = [0, 0], sizes = [16, 8], strides = [1, 1]} : vector<16x24xf32> to vector<16x8xf32>
    %127 = vector.extract_strided_slice %123 {offsets = [0, 8], sizes = [16, 8], strides = [1, 1]} : vector<16x24xf32> to vector<16x8xf32>
    %128 = vector.extract_strided_slice %123 {offsets = [0, 16], sizes = [16, 8], strides = [1, 1]} : vector<16x24xf32> to vector<16x8xf32>
    %129 = arith.mulf %127, %109 : vector<16x8xf32>
    %130 = arith.mulf %126, %125 : vector<16x8xf32>
    %131 = arith.addf %129, %130 : vector<16x8xf32>
    %132 = math.tanh %131 : vector<16x8xf32>
    %133 = arith.mulf %128, %132 : vector<16x8xf32>
    %c0_40 = arith.constant 0 : index
    %c40 = arith.constant 40 : index
    %134 = vector.load %arg3[%c0_40, %c40] : memref<16x128xf32, #tpu.memory_space<vmem>>, vector<16x8xf32>
    tpu.vector_store %arg3[%c0_40, %c40], %133 {strides = array<i32>} : memref<16x128xf32, #tpu.memory_space<vmem>>, vector<16x8xf32>,
    %c0_41 = arith.constant 0 : index
    %c192 = arith.constant 192 : index
    %135 = vector.load %arg1[%c0_41, %c192] : memref<16x512xf32, #tpu.memory_space<vmem>>, vector<16x32xf32>
    %cst_42 = arith.constant dense<0.000000e+00> : vector<16x32xf32>
    %136 = tpu.matmul %133, %0, %cst_42 {dimension_numbers = #tpu.dot_dimension_numbers<[1], [0], [0], [1], [0, 0, 1, 1], [], []>} : vector<16x8xf32>, vector<8x32xf32>, vector<16x32xf32> -> vector<16x32xf32>
    %137 = arith.addf %135, %136 : vector<16x32xf32>
    %138 = vector.extract_strided_slice %137 {offsets = [0, 0], sizes = [16, 24], strides = [1, 1]} : vector<16x32xf32> to vector<16x24xf32>
    %cst_43 = arith.constant 0.000000e+00 : f32
    %139 = vector.broadcast %cst_43 : f32 to vector<16x24xf32>
    %140 = arith.subf %139, %138 : vector<16x24xf32>
    %141 = math.exp %140 : vector<16x24xf32>
    %cst_44 = arith.constant 1.000000e+00 : f32
    %142 = vector.broadcast %cst_44 : f32 to vector<16x24xf32>
    %143 = arith.addf %142, %141 : vector<16x24xf32>
    %cst_45 = arith.constant 1.000000e+00 : f32
    %144 = vector.broadcast %cst_45 : f32 to vector<16x24xf32>
    %145 = arith.divf %144, %143 : vector<16x24xf32>
    %146 = vector.extract_strided_slice %137 {offsets = [0, 24], sizes = [16, 8], strides = [1, 1]} : vector<16x32xf32> to vector<16x8xf32>
    %147 = math.tanh %146 : vector<16x8xf32>
    %148 = vector.extract_strided_slice %145 {offsets = [0, 0], sizes = [16, 8], strides = [1, 1]} : vector<16x24xf32> to vector<16x8xf32>
    %149 = vector.extract_strided_slice %145 {offsets = [0, 8], sizes = [16, 8], strides = [1, 1]} : vector<16x24xf32> to vector<16x8xf32>
    %150 = vector.extract_strided_slice %145 {offsets = [0, 16], sizes = [16, 8], strides = [1, 1]} : vector<16x24xf32> to vector<16x8xf32>
    %151 = arith.mulf %149, %131 : vector<16x8xf32>
    %152 = arith.mulf %148, %147 : vector<16x8xf32>
    %153 = arith.addf %151, %152 : vector<16x8xf32>
    %154 = math.tanh %153 : vector<16x8xf32>
    %155 = arith.mulf %150, %154 : vector<16x8xf32>
    %c0_46 = arith.constant 0 : index
    %c48 = arith.constant 48 : index
    %156 = vector.load %arg3[%c0_46, %c48] : memref<16x128xf32, #tpu.memory_space<vmem>>, vector<16x8xf32>
    tpu.vector_store %arg3[%c0_46, %c48], %155 {strides = array<i32>} : memref<16x128xf32, #tpu.memory_space<vmem>>, vector<16x8xf32>,
    %c0_47 = arith.constant 0 : index
    %c224 = arith.constant 224 : index
    %157 = vector.load %arg1[%c0_47, %c224] : memref<16x512xf32, #tpu.memory_space<vmem>>, vector<16x32xf32>
    %cst_48 = arith.constant dense<0.000000e+00> : vector<16x32xf32>
    %158 = tpu.matmul %155, %0, %cst_48 {dimension_numbers = #tpu.dot_dimension_numbers<[1], [0], [0], [1], [0, 0, 1, 1], [], []>} : vector<16x8xf32>, vector<8x32xf32>, vector<16x32xf32> -> vector<16x32xf32>
    %159 = arith.addf %157, %158 : vector<16x32xf32>
    %160 = vector.extract_strided_slice %159 {offsets = [0, 0], sizes = [16, 24], strides = [1, 1]} : vector<16x32xf32> to vector<16x24xf32>
    %cst_49 = arith.constant 0.000000e+00 : f32
    %161 = vector.broadcast %cst_49 : f32 to vector<16x24xf32>
    %162 = arith.subf %161, %160 : vector<16x24xf32>
    %163 = math.exp %162 : vector<16x24xf32>
    %cst_50 = arith.constant 1.000000e+00 : f32
    %164 = vector.broadcast %cst_50 : f32 to vector<16x24xf32>
    %165 = arith.addf %164, %163 : vector<16x24xf32>
    %cst_51 = arith.constant 1.000000e+00 : f32
    %166 = vector.broadcast %cst_51 : f32 to vector<16x24xf32>
    %167 = arith.divf %166, %165 : vector<16x24xf32>
    %168 = vector.extract_strided_slice %159 {offsets = [0, 24], sizes = [16, 8], strides = [1, 1]} : vector<16x32xf32> to vector<16x8xf32>
    %169 = math.tanh %168 : vector<16x8xf32>
    %170 = vector.extract_strided_slice %167 {offsets = [0, 0], sizes = [16, 8], strides = [1, 1]} : vector<16x24xf32> to vector<16x8xf32>
    %171 = vector.extract_strided_slice %167 {offsets = [0, 8], sizes = [16, 8], strides = [1, 1]} : vector<16x24xf32> to vector<16x8xf32>
    %172 = vector.extract_strided_slice %167 {offsets = [0, 16], sizes = [16, 8], strides = [1, 1]} : vector<16x24xf32> to vector<16x8xf32>
    %173 = arith.mulf %171, %153 : vector<16x8xf32>
    %174 = arith.mulf %170, %169 : vector<16x8xf32>
    %175 = arith.addf %173, %174 : vector<16x8xf32>
    %176 = math.tanh %175 : vector<16x8xf32>
    %177 = arith.mulf %172, %176 : vector<16x8xf32>
    %c0_52 = arith.constant 0 : index
    %c56 = arith.constant 56 : index
    %178 = vector.load %arg3[%c0_52, %c56] : memref<16x128xf32, #tpu.memory_space<vmem>>, vector<16x8xf32>
    tpu.vector_store %arg3[%c0_52, %c56], %177 {strides = array<i32>} : memref<16x128xf32, #tpu.memory_space<vmem>>, vector<16x8xf32>,
    %c0_53 = arith.constant 0 : index
    %c256 = arith.constant 256 : index
    %179 = vector.load %arg1[%c0_53, %c256] : memref<16x512xf32, #tpu.memory_space<vmem>>, vector<16x32xf32>
    %cst_54 = arith.constant dense<0.000000e+00> : vector<16x32xf32>
    %180 = tpu.matmul %177, %0, %cst_54 {dimension_numbers = #tpu.dot_dimension_numbers<[1], [0], [0], [1], [0, 0, 1, 1], [], []>} : vector<16x8xf32>, vector<8x32xf32>, vector<16x32xf32> -> vector<16x32xf32>
    %181 = arith.addf %179, %180 : vector<16x32xf32>
    %182 = vector.extract_strided_slice %181 {offsets = [0, 0], sizes = [16, 24], strides = [1, 1]} : vector<16x32xf32> to vector<16x24xf32>
    %cst_55 = arith.constant 0.000000e+00 : f32
    %183 = vector.broadcast %cst_55 : f32 to vector<16x24xf32>
    %184 = arith.subf %183, %182 : vector<16x24xf32>
    %185 = math.exp %184 : vector<16x24xf32>
    %cst_56 = arith.constant 1.000000e+00 : f32
    %186 = vector.broadcast %cst_56 : f32 to vector<16x24xf32>
    %187 = arith.addf %186, %185 : vector<16x24xf32>
    %cst_57 = arith.constant 1.000000e+00 : f32
    %188 = vector.broadcast %cst_57 : f32 to vector<16x24xf32>
    %189 = arith.divf %188, %187 : vector<16x24xf32>
    %190 = vector.extract_strided_slice %181 {offsets = [0, 24], sizes = [16, 8], strides = [1, 1]} : vector<16x32xf32> to vector<16x8xf32>
    %191 = math.tanh %190 : vector<16x8xf32>
    %192 = vector.extract_strided_slice %189 {offsets = [0, 0], sizes = [16, 8], strides = [1, 1]} : vector<16x24xf32> to vector<16x8xf32>
    %193 = vector.extract_strided_slice %189 {offsets = [0, 8], sizes = [16, 8], strides = [1, 1]} : vector<16x24xf32> to vector<16x8xf32>
    %194 = vector.extract_strided_slice %189 {offsets = [0, 16], sizes = [16, 8], strides = [1, 1]} : vector<16x24xf32> to vector<16x8xf32>
    %195 = arith.mulf %193, %175 : vector<16x8xf32>
    %196 = arith.mulf %192, %191 : vector<16x8xf32>
    %197 = arith.addf %195, %196 : vector<16x8xf32>
    %198 = math.tanh %197 : vector<16x8xf32>
    %199 = arith.mulf %194, %198 : vector<16x8xf32>
    %c0_58 = arith.constant 0 : index
    %c64_59 = arith.constant 64 : index
    %200 = vector.load %arg3[%c0_58, %c64_59] : memref<16x128xf32, #tpu.memory_space<vmem>>, vector<16x8xf32>
    tpu.vector_store %arg3[%c0_58, %c64_59], %199 {strides = array<i32>} : memref<16x128xf32, #tpu.memory_space<vmem>>, vector<16x8xf32>,
    %c0_60 = arith.constant 0 : index
    %c288 = arith.constant 288 : index
    %201 = vector.load %arg1[%c0_60, %c288] : memref<16x512xf32, #tpu.memory_space<vmem>>, vector<16x32xf32>
    %cst_61 = arith.constant dense<0.000000e+00> : vector<16x32xf32>
    %202 = tpu.matmul %199, %0, %cst_61 {dimension_numbers = #tpu.dot_dimension_numbers<[1], [0], [0], [1], [0, 0, 1, 1], [], []>} : vector<16x8xf32>, vector<8x32xf32>, vector<16x32xf32> -> vector<16x32xf32>
    %203 = arith.addf %201, %202 : vector<16x32xf32>
    %204 = vector.extract_strided_slice %203 {offsets = [0, 0], sizes = [16, 24], strides = [1, 1]} : vector<16x32xf32> to vector<16x24xf32>
    %cst_62 = arith.constant 0.000000e+00 : f32
    %205 = vector.broadcast %cst_62 : f32 to vector<16x24xf32>
    %206 = arith.subf %205, %204 : vector<16x24xf32>
    %207 = math.exp %206 : vector<16x24xf32>
    %cst_63 = arith.constant 1.000000e+00 : f32
    %208 = vector.broadcast %cst_63 : f32 to vector<16x24xf32>
    %209 = arith.addf %208, %207 : vector<16x24xf32>
    %cst_64 = arith.constant 1.000000e+00 : f32
    %210 = vector.broadcast %cst_64 : f32 to vector<16x24xf32>
    %211 = arith.divf %210, %209 : vector<16x24xf32>
    %212 = vector.extract_strided_slice %203 {offsets = [0, 24], sizes = [16, 8], strides = [1, 1]} : vector<16x32xf32> to vector<16x8xf32>
    %213 = math.tanh %212 : vector<16x8xf32>
    %214 = vector.extract_strided_slice %211 {offsets = [0, 0], sizes = [16, 8], strides = [1, 1]} : vector<16x24xf32> to vector<16x8xf32>
    %215 = vector.extract_strided_slice %211 {offsets = [0, 8], sizes = [16, 8], strides = [1, 1]} : vector<16x24xf32> to vector<16x8xf32>
    %216 = vector.extract_strided_slice %211 {offsets = [0, 16], sizes = [16, 8], strides = [1, 1]} : vector<16x24xf32> to vector<16x8xf32>
    %217 = arith.mulf %215, %197 : vector<16x8xf32>
    %218 = arith.mulf %214, %213 : vector<16x8xf32>
    %219 = arith.addf %217, %218 : vector<16x8xf32>
    %220 = math.tanh %219 : vector<16x8xf32>
    %221 = arith.mulf %216, %220 : vector<16x8xf32>
    %c0_65 = arith.constant 0 : index
    %c72 = arith.constant 72 : index
    %222 = vector.load %arg3[%c0_65, %c72] : memref<16x128xf32, #tpu.memory_space<vmem>>, vector<16x8xf32>
    tpu.vector_store %arg3[%c0_65, %c72], %221 {strides = array<i32>} : memref<16x128xf32, #tpu.memory_space<vmem>>, vector<16x8xf32>,
    %c0_66 = arith.constant 0 : index
    %c320 = arith.constant 320 : index
    %223 = vector.load %arg1[%c0_66, %c320] : memref<16x512xf32, #tpu.memory_space<vmem>>, vector<16x32xf32>
    %cst_67 = arith.constant dense<0.000000e+00> : vector<16x32xf32>
    %224 = tpu.matmul %221, %0, %cst_67 {dimension_numbers = #tpu.dot_dimension_numbers<[1], [0], [0], [1], [0, 0, 1, 1], [], []>} : vector<16x8xf32>, vector<8x32xf32>, vector<16x32xf32> -> vector<16x32xf32>
    %225 = arith.addf %223, %224 : vector<16x32xf32>
    %226 = vector.extract_strided_slice %225 {offsets = [0, 0], sizes = [16, 24], strides = [1, 1]} : vector<16x32xf32> to vector<16x24xf32>
    %cst_68 = arith.constant 0.000000e+00 : f32
    %227 = vector.broadcast %cst_68 : f32 to vector<16x24xf32>
    %228 = arith.subf %227, %226 : vector<16x24xf32>
    %229 = math.exp %228 : vector<16x24xf32>
    %cst_69 = arith.constant 1.000000e+00 : f32
    %230 = vector.broadcast %cst_69 : f32 to vector<16x24xf32>
    %231 = arith.addf %230, %229 : vector<16x24xf32>
    %cst_70 = arith.constant 1.000000e+00 : f32
    %232 = vector.broadcast %cst_70 : f32 to vector<16x24xf32>
    %233 = arith.divf %232, %231 : vector<16x24xf32>
    %234 = vector.extract_strided_slice %225 {offsets = [0, 24], sizes = [16, 8], strides = [1, 1]} : vector<16x32xf32> to vector<16x8xf32>
    %235 = math.tanh %234 : vector<16x8xf32>
    %236 = vector.extract_strided_slice %233 {offsets = [0, 0], sizes = [16, 8], strides = [1, 1]} : vector<16x24xf32> to vector<16x8xf32>
    %237 = vector.extract_strided_slice %233 {offsets = [0, 8], sizes = [16, 8], strides = [1, 1]} : vector<16x24xf32> to vector<16x8xf32>
    %238 = vector.extract_strided_slice %233 {offsets = [0, 16], sizes = [16, 8], strides = [1, 1]} : vector<16x24xf32> to vector<16x8xf32>
    %239 = arith.mulf %237, %219 : vector<16x8xf32>
    %240 = arith.mulf %236, %235 : vector<16x8xf32>
    %241 = arith.addf %239, %240 : vector<16x8xf32>
    %242 = math.tanh %241 : vector<16x8xf32>
    %243 = arith.mulf %238, %242 : vector<16x8xf32>
    %c0_71 = arith.constant 0 : index
    %c80 = arith.constant 80 : index
    %244 = vector.load %arg3[%c0_71, %c80] : memref<16x128xf32, #tpu.memory_space<vmem>>, vector<16x8xf32>
    tpu.vector_store %arg3[%c0_71, %c80], %243 {strides = array<i32>} : memref<16x128xf32, #tpu.memory_space<vmem>>, vector<16x8xf32>,
    %c0_72 = arith.constant 0 : index
    %c352 = arith.constant 352 : index
    %245 = vector.load %arg1[%c0_72, %c352] : memref<16x512xf32, #tpu.memory_space<vmem>>, vector<16x32xf32>
    %cst_73 = arith.constant dense<0.000000e+00> : vector<16x32xf32>
    %246 = tpu.matmul %243, %0, %cst_73 {dimension_numbers = #tpu.dot_dimension_numbers<[1], [0], [0], [1], [0, 0, 1, 1], [], []>} : vector<16x8xf32>, vector<8x32xf32>, vector<16x32xf32> -> vector<16x32xf32>
    %247 = arith.addf %245, %246 : vector<16x32xf32>
    %248 = vector.extract_strided_slice %247 {offsets = [0, 0], sizes = [16, 24], strides = [1, 1]} : vector<16x32xf32> to vector<16x24xf32>
    %cst_74 = arith.constant 0.000000e+00 : f32
    %249 = vector.broadcast %cst_74 : f32 to vector<16x24xf32>
    %250 = arith.subf %249, %248 : vector<16x24xf32>
    %251 = math.exp %250 : vector<16x24xf32>
    %cst_75 = arith.constant 1.000000e+00 : f32
    %252 = vector.broadcast %cst_75 : f32 to vector<16x24xf32>
    %253 = arith.addf %252, %251 : vector<16x24xf32>
    %cst_76 = arith.constant 1.000000e+00 : f32
    %254 = vector.broadcast %cst_76 : f32 to vector<16x24xf32>
    %255 = arith.divf %254, %253 : vector<16x24xf32>
    %256 = vector.extract_strided_slice %247 {offsets = [0, 24], sizes = [16, 8], strides = [1, 1]} : vector<16x32xf32> to vector<16x8xf32>
    %257 = math.tanh %256 : vector<16x8xf32>
    %258 = vector.extract_strided_slice %255 {offsets = [0, 0], sizes = [16, 8], strides = [1, 1]} : vector<16x24xf32> to vector<16x8xf32>
    %259 = vector.extract_strided_slice %255 {offsets = [0, 8], sizes = [16, 8], strides = [1, 1]} : vector<16x24xf32> to vector<16x8xf32>
    %260 = vector.extract_strided_slice %255 {offsets = [0, 16], sizes = [16, 8], strides = [1, 1]} : vector<16x24xf32> to vector<16x8xf32>
    %261 = arith.mulf %259, %241 : vector<16x8xf32>
    %262 = arith.mulf %258, %257 : vector<16x8xf32>
    %263 = arith.addf %261, %262 : vector<16x8xf32>
    %264 = math.tanh %263 : vector<16x8xf32>
    %265 = arith.mulf %260, %264 : vector<16x8xf32>
    %c0_77 = arith.constant 0 : index
    %c88 = arith.constant 88 : index
    %266 = vector.load %arg3[%c0_77, %c88] : memref<16x128xf32, #tpu.memory_space<vmem>>, vector<16x8xf32>
    tpu.vector_store %arg3[%c0_77, %c88], %265 {strides = array<i32>} : memref<16x128xf32, #tpu.memory_space<vmem>>, vector<16x8xf32>,
    %c0_78 = arith.constant 0 : index
    %c384 = arith.constant 384 : index
    %267 = vector.load %arg1[%c0_78, %c384] : memref<16x512xf32, #tpu.memory_space<vmem>>, vector<16x32xf32>
    %cst_79 = arith.constant dense<0.000000e+00> : vector<16x32xf32>
    %268 = tpu.matmul %265, %0, %cst_79 {dimension_numbers = #tpu.dot_dimension_numbers<[1], [0], [0], [1], [0, 0, 1, 1], [], []>} : vector<16x8xf32>, vector<8x32xf32>, vector<16x32xf32> -> vector<16x32xf32>
    %269 = arith.addf %267, %268 : vector<16x32xf32>
    %270 = vector.extract_strided_slice %269 {offsets = [0, 0], sizes = [16, 24], strides = [1, 1]} : vector<16x32xf32> to vector<16x24xf32>
    %cst_80 = arith.constant 0.000000e+00 : f32
    %271 = vector.broadcast %cst_80 : f32 to vector<16x24xf32>
    %272 = arith.subf %271, %270 : vector<16x24xf32>
    %273 = math.exp %272 : vector<16x24xf32>
    %cst_81 = arith.constant 1.000000e+00 : f32
    %274 = vector.broadcast %cst_81 : f32 to vector<16x24xf32>
    %275 = arith.addf %274, %273 : vector<16x24xf32>
    %cst_82 = arith.constant 1.000000e+00 : f32
    %276 = vector.broadcast %cst_82 : f32 to vector<16x24xf32>
    %277 = arith.divf %276, %275 : vector<16x24xf32>
    %278 = vector.extract_strided_slice %269 {offsets = [0, 24], sizes = [16, 8], strides = [1, 1]} : vector<16x32xf32> to vector<16x8xf32>
    %279 = math.tanh %278 : vector<16x8xf32>
    %280 = vector.extract_strided_slice %277 {offsets = [0, 0], sizes = [16, 8], strides = [1, 1]} : vector<16x24xf32> to vector<16x8xf32>
    %281 = vector.extract_strided_slice %277 {offsets = [0, 8], sizes = [16, 8], strides = [1, 1]} : vector<16x24xf32> to vector<16x8xf32>
    %282 = vector.extract_strided_slice %277 {offsets = [0, 16], sizes = [16, 8], strides = [1, 1]} : vector<16x24xf32> to vector<16x8xf32>
    %283 = arith.mulf %281, %263 : vector<16x8xf32>
    %284 = arith.mulf %280, %279 : vector<16x8xf32>
    %285 = arith.addf %283, %284 : vector<16x8xf32>
    %286 = math.tanh %285 : vector<16x8xf32>
    %287 = arith.mulf %282, %286 : vector<16x8xf32>
    %c0_83 = arith.constant 0 : index
    %c96_84 = arith.constant 96 : index
    %288 = vector.load %arg3[%c0_83, %c96_84] : memref<16x128xf32, #tpu.memory_space<vmem>>, vector<16x8xf32>
    tpu.vector_store %arg3[%c0_83, %c96_84], %287 {strides = array<i32>} : memref<16x128xf32, #tpu.memory_space<vmem>>, vector<16x8xf32>,
    %c0_85 = arith.constant 0 : index
    %c416 = arith.constant 416 : index
    %289 = vector.load %arg1[%c0_85, %c416] : memref<16x512xf32, #tpu.memory_space<vmem>>, vector<16x32xf32>
    %cst_86 = arith.constant dense<0.000000e+00> : vector<16x32xf32>
    %290 = tpu.matmul %287, %0, %cst_86 {dimension_numbers = #tpu.dot_dimension_numbers<[1], [0], [0], [1], [0, 0, 1, 1], [], []>} : vector<16x8xf32>, vector<8x32xf32>, vector<16x32xf32> -> vector<16x32xf32>
    %291 = arith.addf %289, %290 : vector<16x32xf32>
    %292 = vector.extract_strided_slice %291 {offsets = [0, 0], sizes = [16, 24], strides = [1, 1]} : vector<16x32xf32> to vector<16x24xf32>
    %cst_87 = arith.constant 0.000000e+00 : f32
    %293 = vector.broadcast %cst_87 : f32 to vector<16x24xf32>
    %294 = arith.subf %293, %292 : vector<16x24xf32>
    %295 = math.exp %294 : vector<16x24xf32>
    %cst_88 = arith.constant 1.000000e+00 : f32
    %296 = vector.broadcast %cst_88 : f32 to vector<16x24xf32>
    %297 = arith.addf %296, %295 : vector<16x24xf32>
    %cst_89 = arith.constant 1.000000e+00 : f32
    %298 = vector.broadcast %cst_89 : f32 to vector<16x24xf32>
    %299 = arith.divf %298, %297 : vector<16x24xf32>
    %300 = vector.extract_strided_slice %291 {offsets = [0, 24], sizes = [16, 8], strides = [1, 1]} : vector<16x32xf32> to vector<16x8xf32>
    %301 = math.tanh %300 : vector<16x8xf32>
    %302 = vector.extract_strided_slice %299 {offsets = [0, 0], sizes = [16, 8], strides = [1, 1]} : vector<16x24xf32> to vector<16x8xf32>
    %303 = vector.extract_strided_slice %299 {offsets = [0, 8], sizes = [16, 8], strides = [1, 1]} : vector<16x24xf32> to vector<16x8xf32>
    %304 = vector.extract_strided_slice %299 {offsets = [0, 16], sizes = [16, 8], strides = [1, 1]} : vector<16x24xf32> to vector<16x8xf32>
    %305 = arith.mulf %303, %285 : vector<16x8xf32>
    %306 = arith.mulf %302, %301 : vector<16x8xf32>
    %307 = arith.addf %305, %306 : vector<16x8xf32>
    %308 = math.tanh %307 : vector<16x8xf32>
    %309 = arith.mulf %304, %308 : vector<16x8xf32>
    %c0_90 = arith.constant 0 : index
    %c104 = arith.constant 104 : index
    %310 = vector.load %arg3[%c0_90, %c104] : memref<16x128xf32, #tpu.memory_space<vmem>>, vector<16x8xf32>
    tpu.vector_store %arg3[%c0_90, %c104], %309 {strides = array<i32>} : memref<16x128xf32, #tpu.memory_space<vmem>>, vector<16x8xf32>,
    %c0_91 = arith.constant 0 : index
    %c448 = arith.constant 448 : index
    %311 = vector.load %arg1[%c0_91, %c448] : memref<16x512xf32, #tpu.memory_space<vmem>>, vector<16x32xf32>
    %cst_92 = arith.constant dense<0.000000e+00> : vector<16x32xf32>
    %312 = tpu.matmul %309, %0, %cst_92 {dimension_numbers = #tpu.dot_dimension_numbers<[1], [0], [0], [1], [0, 0, 1, 1], [], []>} : vector<16x8xf32>, vector<8x32xf32>, vector<16x32xf32> -> vector<16x32xf32>
    %313 = arith.addf %311, %312 : vector<16x32xf32>
    %314 = vector.extract_strided_slice %313 {offsets = [0, 0], sizes = [16, 24], strides = [1, 1]} : vector<16x32xf32> to vector<16x24xf32>
    %cst_93 = arith.constant 0.000000e+00 : f32
    %315 = vector.broadcast %cst_93 : f32 to vector<16x24xf32>
    %316 = arith.subf %315, %314 : vector<16x24xf32>
    %317 = math.exp %316 : vector<16x24xf32>
    %cst_94 = arith.constant 1.000000e+00 : f32
    %318 = vector.broadcast %cst_94 : f32 to vector<16x24xf32>
    %319 = arith.addf %318, %317 : vector<16x24xf32>
    %cst_95 = arith.constant 1.000000e+00 : f32
    %320 = vector.broadcast %cst_95 : f32 to vector<16x24xf32>
    %321 = arith.divf %320, %319 : vector<16x24xf32>
    %322 = vector.extract_strided_slice %313 {offsets = [0, 24], sizes = [16, 8], strides = [1, 1]} : vector<16x32xf32> to vector<16x8xf32>
    %323 = math.tanh %322 : vector<16x8xf32>
    %324 = vector.extract_strided_slice %321 {offsets = [0, 0], sizes = [16, 8], strides = [1, 1]} : vector<16x24xf32> to vector<16x8xf32>
    %325 = vector.extract_strided_slice %321 {offsets = [0, 8], sizes = [16, 8], strides = [1, 1]} : vector<16x24xf32> to vector<16x8xf32>
    %326 = vector.extract_strided_slice %321 {offsets = [0, 16], sizes = [16, 8], strides = [1, 1]} : vector<16x24xf32> to vector<16x8xf32>
    %327 = arith.mulf %325, %307 : vector<16x8xf32>
    %328 = arith.mulf %324, %323 : vector<16x8xf32>
    %329 = arith.addf %327, %328 : vector<16x8xf32>
    %330 = math.tanh %329 : vector<16x8xf32>
    %331 = arith.mulf %326, %330 : vector<16x8xf32>
    %c0_96 = arith.constant 0 : index
    %c112 = arith.constant 112 : index
    %332 = vector.load %arg3[%c0_96, %c112] : memref<16x128xf32, #tpu.memory_space<vmem>>, vector<16x8xf32>
    tpu.vector_store %arg3[%c0_96, %c112], %331 {strides = array<i32>} : memref<16x128xf32, #tpu.memory_space<vmem>>, vector<16x8xf32>,
    %c0_97 = arith.constant 0 : index
    %c480 = arith.constant 480 : index
    %333 = vector.load %arg1[%c0_97, %c480] : memref<16x512xf32, #tpu.memory_space<vmem>>, vector<16x32xf32>
    %cst_98 = arith.constant dense<0.000000e+00> : vector<16x32xf32>
    %334 = tpu.matmul %331, %0, %cst_98 {dimension_numbers = #tpu.dot_dimension_numbers<[1], [0], [0], [1], [0, 0, 1, 1], [], []>} : vector<16x8xf32>, vector<8x32xf32>, vector<16x32xf32> -> vector<16x32xf32>
    %335 = arith.addf %333, %334 : vector<16x32xf32>
    %336 = vector.extract_strided_slice %335 {offsets = [0, 0], sizes = [16, 24], strides = [1, 1]} : vector<16x32xf32> to vector<16x24xf32>
    %cst_99 = arith.constant 0.000000e+00 : f32
    %337 = vector.broadcast %cst_99 : f32 to vector<16x24xf32>
    %338 = arith.subf %337, %336 : vector<16x24xf32>
    %339 = math.exp %338 : vector<16x24xf32>
    %cst_100 = arith.constant 1.000000e+00 : f32
    %340 = vector.broadcast %cst_100 : f32 to vector<16x24xf32>
    %341 = arith.addf %340, %339 : vector<16x24xf32>
    %cst_101 = arith.constant 1.000000e+00 : f32
    %342 = vector.broadcast %cst_101 : f32 to vector<16x24xf32>
    %343 = arith.divf %342, %341 : vector<16x24xf32>
    %344 = vector.extract_strided_slice %335 {offsets = [0, 24], sizes = [16, 8], strides = [1, 1]} : vector<16x32xf32> to vector<16x8xf32>
    %345 = math.tanh %344 : vector<16x8xf32>
    %346 = vector.extract_strided_slice %343 {offsets = [0, 0], sizes = [16, 8], strides = [1, 1]} : vector<16x24xf32> to vector<16x8xf32>
    %347 = vector.extract_strided_slice %343 {offsets = [0, 8], sizes = [16, 8], strides = [1, 1]} : vector<16x24xf32> to vector<16x8xf32>
    %348 = vector.extract_strided_slice %343 {offsets = [0, 16], sizes = [16, 8], strides = [1, 1]} : vector<16x24xf32> to vector<16x8xf32>
    %349 = arith.mulf %347, %329 : vector<16x8xf32>
    %350 = arith.mulf %346, %345 : vector<16x8xf32>
    %351 = arith.addf %349, %350 : vector<16x8xf32>
    %352 = math.tanh %351 : vector<16x8xf32>
    %353 = arith.mulf %348, %352 : vector<16x8xf32>
    %c0_102 = arith.constant 0 : index
    %c120 = arith.constant 120 : index
    %354 = vector.load %arg3[%c0_102, %c120] : memref<16x128xf32, #tpu.memory_space<vmem>>, vector<16x8xf32>
    tpu.vector_store %arg3[%c0_102, %c120], %353 {strides = array<i32>} : memref<16x128xf32, #tpu.memory_space<vmem>>, vector<16x8xf32>,
    return
  }
  func.func @transform_0(%arg0: i32) -> (i32, i32) {
    %c0_i32 = arith.constant 0 : i32
    %c0_i32_0 = arith.constant 0 : i32
    return %arg0, %c0_i32 : i32, i32
  }
  func.func @transform_1(%arg0: i32) -> (i32, i32) {
    %c0_i32 = arith.constant 0 : i32
    %c0_i32_0 = arith.constant 0 : i32
    %c0_i32_1 = arith.constant 0 : i32
    return %c0_i32, %c0_i32_0 : i32, i32
  }
  func.func @transform_2(%arg0: i32) -> (i32, i32) {
    %c0_i32 = arith.constant 0 : i32
    %c0_i32_0 = arith.constant 0 : i32
    return %arg0, %c0_i32 : i32, i32
  }
}

module attributes {stable_mosaic.version = 11 : i64} {
  func.func @lstm_batch_linear_kernel(%arg0: memref<2x512xf32, #tpu.memory_space<vmem>>, %arg1: memref<128x512xf32, #tpu.memory_space<vmem>>, %arg2: memref<128x2xf32, #tpu.memory_space<vmem>>, %arg3: memref<1x2xf32, #tpu.memory_space<vmem>>, %arg4: memref<2x2xf32, #tpu.memory_space<vmem>>) attributes {dimension_semantics = [], scalar_prefetch = 0 : i64, scratch_operands = 0 : i64, tpu.core_type = #tpu.core_type<tc>} {
    %c0 = arith.constant 0 : index
    %c0_0 = arith.constant 0 : index
    %0 = vector.load %arg1[%c0, %c0_0] : memref<128x512xf32, #tpu.memory_space<vmem>>, vector<128x512xf32>
    %cst = arith.constant 0.000000e+00 : f32
    %1 = vector.broadcast %cst : f32 to vector<1x128xf32>
    %cst_1 = arith.constant 0.000000e+00 : f32
    %2 = vector.broadcast %cst_1 : f32 to vector<1x128xf32>
    %c0_2 = arith.constant 0 : index
    %c0_3 = arith.constant 0 : index
    %3 = vector.load %arg0[%c0_2, %c0_3] : memref<2x512xf32, #tpu.memory_space<vmem>>, vector<1x512xf32>
    %cst_4 = arith.constant dense<0.000000e+00> : vector<1x512xf32>
    %4 = tpu.matmul %1, %0, %cst_4 {dimension_numbers = #tpu.dot_dimension_numbers<[1], [0], [0], [1], [0, 0, 1, 1], [], []>} : vector<1x128xf32>, vector<128x512xf32>, vector<1x512xf32> -> vector<1x512xf32>
    %5 = arith.addf %3, %4 : vector<1x512xf32>
    %6 = vector.extract_strided_slice %5 {offsets = [0, 0], sizes = [1, 384], strides = [1, 1]} : vector<1x512xf32> to vector<1x384xf32>
    %cst_5 = arith.constant 0.000000e+00 : f32
    %7 = vector.broadcast %cst_5 : f32 to vector<1x384xf32>
    %8 = arith.subf %7, %6 : vector<1x384xf32>
    %9 = math.exp %8 : vector<1x384xf32>
    %cst_6 = arith.constant 1.000000e+00 : f32
    %10 = vector.broadcast %cst_6 : f32 to vector<1x384xf32>
    %11 = arith.addf %10, %9 : vector<1x384xf32>
    %cst_7 = arith.constant 1.000000e+00 : f32
    %12 = vector.broadcast %cst_7 : f32 to vector<1x384xf32>
    %13 = arith.divf %12, %11 : vector<1x384xf32>
    %14 = vector.extract_strided_slice %5 {offsets = [0, 384], sizes = [1, 128], strides = [1, 1]} : vector<1x512xf32> to vector<1x128xf32>
    %15 = math.tanh %14 : vector<1x128xf32>
    %16 = vector.extract_strided_slice %13 {offsets = [0, 0], sizes = [1, 128], strides = [1, 1]} : vector<1x384xf32> to vector<1x128xf32>
    %17 = vector.extract_strided_slice %13 {offsets = [0, 128], sizes = [1, 128], strides = [1, 1]} : vector<1x384xf32> to vector<1x128xf32>
    %18 = vector.extract_strided_slice %13 {offsets = [0, 256], sizes = [1, 128], strides = [1, 1]} : vector<1x384xf32> to vector<1x128xf32>
    %19 = arith.mulf %17, %2 : vector<1x128xf32>
    %20 = arith.mulf %16, %15 : vector<1x128xf32>
    %21 = arith.addf %19, %20 : vector<1x128xf32>
    %22 = math.tanh %21 : vector<1x128xf32>
    %23 = arith.mulf %18, %22 : vector<1x128xf32>
    %c1 = arith.constant 1 : index
    %c0_8 = arith.constant 0 : index
    %24 = vector.load %arg0[%c1, %c0_8] : memref<2x512xf32, #tpu.memory_space<vmem>>, vector<1x512xf32>
    %cst_9 = arith.constant dense<0.000000e+00> : vector<1x512xf32>
    %25 = tpu.matmul %23, %0, %cst_9 {dimension_numbers = #tpu.dot_dimension_numbers<[1], [0], [0], [1], [0, 0, 1, 1], [], []>} : vector<1x128xf32>, vector<128x512xf32>, vector<1x512xf32> -> vector<1x512xf32>
    %26 = arith.addf %24, %25 : vector<1x512xf32>
    %27 = vector.extract_strided_slice %26 {offsets = [0, 0], sizes = [1, 384], strides = [1, 1]} : vector<1x512xf32> to vector<1x384xf32>
    %cst_10 = arith.constant 0.000000e+00 : f32
    %28 = vector.broadcast %cst_10 : f32 to vector<1x384xf32>
    %29 = arith.subf %28, %27 : vector<1x384xf32>
    %30 = math.exp %29 : vector<1x384xf32>
    %cst_11 = arith.constant 1.000000e+00 : f32
    %31 = vector.broadcast %cst_11 : f32 to vector<1x384xf32>
    %32 = arith.addf %31, %30 : vector<1x384xf32>
    %cst_12 = arith.constant 1.000000e+00 : f32
    %33 = vector.broadcast %cst_12 : f32 to vector<1x384xf32>
    %34 = arith.divf %33, %32 : vector<1x384xf32>
    %35 = vector.extract_strided_slice %26 {offsets = [0, 384], sizes = [1, 128], strides = [1, 1]} : vector<1x512xf32> to vector<1x128xf32>
    %36 = math.tanh %35 : vector<1x128xf32>
    %37 = vector.extract_strided_slice %34 {offsets = [0, 0], sizes = [1, 128], strides = [1, 1]} : vector<1x384xf32> to vector<1x128xf32>
    %38 = vector.extract_strided_slice %34 {offsets = [0, 128], sizes = [1, 128], strides = [1, 1]} : vector<1x384xf32> to vector<1x128xf32>
    %39 = vector.extract_strided_slice %34 {offsets = [0, 256], sizes = [1, 128], strides = [1, 1]} : vector<1x384xf32> to vector<1x128xf32>
    %40 = arith.mulf %38, %21 : vector<1x128xf32>
    %41 = arith.mulf %37, %36 : vector<1x128xf32>
    %42 = arith.addf %40, %41 : vector<1x128xf32>
    %43 = math.tanh %42 : vector<1x128xf32>
    %44 = arith.mulf %39, %43 : vector<1x128xf32>
    %45 = tpu.concatenate %23, %44 in 0 : vector<1x128xf32>, vector<1x128xf32> -> vector<2x128xf32>
    %c0_13 = arith.constant 0 : index
    %c0_14 = arith.constant 0 : index
    %46 = vector.load %arg3[%c0_13, %c0_14] : memref<1x2xf32, #tpu.memory_space<vmem>>, vector<1x2xf32>
    %c0_15 = arith.constant 0 : index
    %c0_16 = arith.constant 0 : index
    %47 = vector.load %arg2[%c0_15, %c0_16] : memref<128x2xf32, #tpu.memory_space<vmem>>, vector<128x2xf32>
    %cst_17 = arith.constant dense<0.000000e+00> : vector<2x2xf32>
    %48 = tpu.matmul %45, %47, %cst_17 {dimension_numbers = #tpu.dot_dimension_numbers<[1], [0], [0], [1], [0, 0, 1, 1], [], []>} : vector<2x128xf32>, vector<128x2xf32>, vector<2x2xf32> -> vector<2x2xf32>
    %49 = vector.broadcast %46 : vector<1x2xf32> to vector<2x2xf32>
    %50 = arith.addf %49, %48 : vector<2x2xf32>
    %c0_18 = arith.constant 0 : index
    %c0_19 = arith.constant 0 : index
    %51 = vector.load %arg4[%c0_18, %c0_19] : memref<2x2xf32, #tpu.memory_space<vmem>>, vector<2x2xf32>
    tpu.vector_store %arg4[%c0_18, %c0_19], %50 {strides = array<i32>} : memref<2x2xf32, #tpu.memory_space<vmem>>, vector<2x2xf32>,
    return
  }
}

</mosaic_0001>

<llo_original>
// kernel: double_lstm_forward.3
$region0: #{double_lstm_forward.3}
  #allocation0 [shape = 'u32[]', space=smem, size = 0x4, offset = 0x4, fixed_abs, tag = 'smem constant byte address 0x4 - core index']
  #allocation1 [shape = 'u32[72,128]{1,0:T(1,128)}', space=vmem, size = 0x9000, scoped, tag = 'internal scratch']
  %s0 = inlined_call_operand.vmem [shape: f32[2,512], index: 0, kind: input, shape index: {}]
  %s1 = inlined_call_operand.vmem [shape: f32[128,512], index: 1, kind: input, shape index: {}]
  %s2 = inlined_call_operand.vmem [shape: f32[128,2], index: 2, kind: input, shape index: {}]
  %s3 = inlined_call_operand.vmem [shape: f32[1,2], index: 3, kind: input, shape index: {}]
  %s4 = inlined_call_operand.hbm [shape: f32[2,2], index: 4, kind: output, shape index: {}]
  %s5 = sld [smem:[#allocation0]]
  $region26: #{double_lstm_forward.3} parent=0
    _
  %s7 = ssub.s32 1, %s5
  %s8 = scalar_select 0, %s7, %s5
  $region1: #{double_lstm_forward.3} parent=0
    #allocation2 [shape = 'u8[1024]{0}', space=vmem, size = 0x400, scoped, tag = 'output window, operand 0, single buffered']
    #allocation3 [shape = 's32[1]{0}', space=sflag, size = 0x4, scoped, tag = 'scoped memory for double_lstm_forward.3']
    %9 = vsyncpa [#allocation3], 0
    // Predicated region
    $region2: #{double_lstm_forward.3} parent=1 // pred_check
      _
    $region3: #{double_lstm_forward.3} parent=1 // pred_check_branch
      %11 = sbr.rel (0) target = $region5
    $region4: #{double_lstm_forward.3} parent=1 // pred_region
      _
    $region5: #{double_lstm_forward.3} parent=1 // pred_fallthru
      _
    // Predicated region
    $region6: #{double_lstm_forward.3} parent=1 // pred_check
      _
    $region7: #{double_lstm_forward.3} parent=1 // pred_check_branch
      %13 = sbr.rel (0) target = $region9
    $region8: #{double_lstm_forward.3} parent=1 // pred_region
      _
    $region9: #{double_lstm_forward.3} parent=1 // pred_fallthru
      _
    // Predicated region
    $region10: #{double_lstm_forward.3} parent=1 // pred_check
      _
    $region11: #{double_lstm_forward.3} parent=1 // pred_check_branch
      %15 = sbr.rel (0) target = $region13
    $region12: #{double_lstm_forward.3} parent=1 // pred_region
      _
    $region13: #{double_lstm_forward.3} parent=1 // pred_fallthru
      _
    // Predicated region
    $region14: #{double_lstm_forward.3} parent=1 // pred_check
      _
    $region15: #{double_lstm_forward.3} parent=1 // pred_check_branch
      %17 = sbr.rel (0) target = $region17
    $region16: #{double_lstm_forward.3} parent=1 // pred_region
      _
    $region17: #{double_lstm_forward.3} parent=1 // pred_fallthru
      _
    %v18 = vld [vmem:[%s1] sm:$0xff]
    %v19 = vld [vmem:[%s1 + $0x8] sm:$0xff]
    %v20 = vld [vmem:[%s1 + $0x10] sm:$0xff]
    %v21 = vld [vmem:[%s1 + $0x18] sm:$0xff]
    %v22 = vld [vmem:[%s1 + $0x20] sm:$0xff]
    %v23 = vld [vmem:[%s1 + $0x28] sm:$0xff]
    %v24 = vld [vmem:[%s1 + $0x30] sm:$0xff]
    %v25 = vld [vmem:[%s1 + $0x38] sm:$0xff]
    %v26 = vld [vmem:[%s1 + $0x40] sm:$0xff]
    %v27 = vld [vmem:[%s1 + $0x48] sm:$0xff]
    %v28 = vld [vmem:[%s1 + $0x50] sm:$0xff]
    %v29 = vld [vmem:[%s1 + $0x58] sm:$0xff]
    %v30 = vld [vmem:[%s1 + $0x60] sm:$0xff]
    %v31 = vld [vmem:[%s1 + $0x68] sm:$0xff]
    %v32 = vld [vmem:[%s1 + $0x70] sm:$0xff]
    %v33 = vld [vmem:[%s1 + $0x78] sm:$0xff]
    %v34 = vld [vmem:[%s1 + $0x80] sm:$0xff]
    %v35 = vld [vmem:[%s1 + $0x88] sm:$0xff]
    %v36 = vld [vmem:[%s1 + $0x90] sm:$0xff]
    %v37 = vld [vmem:[%s1 + $0x98] sm:$0xff]
    %v38 = vld [vmem:[%s1 + $0xa0] sm:$0xff]
    %v39 = vld [vmem:[%s1 + $0xa8] sm:$0xff]
    %v40 = vld [vmem:[%s1 + $0xb0] sm:$0xff]
    %v41 = vld [vmem:[%s1 + $0xb8] sm:$0xff]
    %v42 = vld [vmem:[%s1 + $0xc0] sm:$0xff]
    %v43 = vld [vmem:[%s1 + $0xc8] sm:$0xff]
    %v44 = vld [vmem:[%s1 + $0xd0] sm:$0xff]
    %v45 = vld [vmem:[%s1 + $0xd8] sm:$0xff]
    %v46 = vld [vmem:[%s1 + $0xe0] sm:$0xff]
    %v47 = vld [vmem:[%s1 + $0xe8] sm:$0xff]
    %v48 = vld [vmem:[%s1 + $0xf0] sm:$0xff]
    %v49 = vld [vmem:[%s1 + $0xf8] sm:$0xff]
    %v50 = vld [vmem:[%s1 + $0x100] sm:$0xff]
    %v51 = vld [vmem:[%s1 + $0x108] sm:$0xff]
    %v52 = vld [vmem:[%s1 + $0x110] sm:$0xff]
    %v53 = vld [vmem:[%s1 + $0x118] sm:$0xff]
    %v54 = vld [vmem:[%s1 + $0x120] sm:$0xff]
    %v55 = vld [vmem:[%s1 + $0x128] sm:$0xff]
    %v56 = vld [vmem:[%s1 + $0x130] sm:$0xff]
    %v57 = vld [vmem:[%s1 + $0x138] sm:$0xff]
    %v58 = vld [vmem:[%s1 + $0x140] sm:$0xff]
    %v59 = vld [vmem:[%s1 + $0x148] sm:$0xff]
    %v60 = vld [vmem:[%s1 + $0x150] sm:$0xff]
    %v61 = vld [vmem:[%s1 + $0x158] sm:$0xff]
    %v62 = vld [vmem:[%s1 + $0x160] sm:$0xff]
    %v63 = vld [vmem:[%s1 + $0x168] sm:$0xff]
    %v64 = vld [vmem:[%s1 + $0x170] sm:$0xff]
    %v65 = vld [vmem:[%s1 + $0x178] sm:$0xff]
    %v66 = vld [vmem:[%s1 + $0x180] sm:$0xff]
    %v67 = vld [vmem:[%s1 + $0x188] sm:$0xff]
    %v68 = vld [vmem:[%s1 + $0x190] sm:$0xff]
    %v69 = vld [vmem:[%s1 + $0x198] sm:$0xff]
    %v70 = vld [vmem:[%s1 + $0x1a0] sm:$0xff]
    %v71 = vld [vmem:[%s1 + $0x1a8] sm:$0xff]
    %v72 = vld [vmem:[%s1 + $0x1b0] sm:$0xff]
    %v73 = vld [vmem:[%s1 + $0x1b8] sm:$0xff]
    %v74 = vld [vmem:[%s1 + $0x1c0] sm:$0xff]
    %v75 = vld [vmem:[%s1 + $0x1c8] sm:$0xff]
    %v76 = vld [vmem:[%s1 + $0x1d0] sm:$0xff]
    %v77 = vld [vmem:[%s1 + $0x1d8] sm:$0xff]
    %v78 = vld [vmem:[%s1 + $0x1e0] sm:$0xff]
    %v79 = vld [vmem:[%s1 + $0x1e8] sm:$0xff]
    %v80 = vld [vmem:[%s1 + $0x1f0] sm:$0xff]
    %v81 = vld [vmem:[%s1 + $0x1f8] sm:$0xff]
    %v82 = vld [vmem:[%s0] ss:$2 sm:$0xf]
    %83 = vmatpush.msra.mxu0 %v78
    %84 = vmatpush.msra.mxu0 %v74
    %85 = vmatpush.msra.mxu0 %v70
    %86 = vmatpush.msra.mxu0 %v66
    %87 = vmatpush.msra.mxu0 %v62
    %88 = vmatpush.msra.mxu0 %v58
    %89 = vmatpush.msra.mxu0 %v54
    %90 = vmatpush.msra.mxu0 %v50
    %91 = vmatpush.msra.mxu0 %v46
    %92 = vmatpush.msra.mxu0 %v42
    %93 = vmatpush.msra.mxu0 %v38
    %94 = vmatpush.msra.mxu0 %v34
    %95 = vmatpush.msra.mxu0 %v30
    %96 = vmatpush.msra.mxu0 %v26
    %97 = vmatpush.msra.mxu0 %v22
    %98 = vmatpush.msra.mxu0 %v18
    %99 = vmatmul.f32.gmra.mxu0 0.0
    %v100 = vpop.f32.mrf.mxu0
    %v101 = vadd.f32 0.0, %v100
    %102 = vdwg.mxu0
    %103 = vmatpush.msra.mxu0 %v79
    %104 = vmatpush.msra.mxu0 %v75
    %105 = vmatpush.msra.mxu0 %v71
    %106 = vmatpush.msra.mxu0 %v67
    %107 = vmatpush.msra.mxu0 %v63
    %108 = vmatpush.msra.mxu0 %v59
    %109 = vmatpush.msra.mxu0 %v55
    %110 = vmatpush.msra.mxu0 %v51
    %111 = vmatpush.msra.mxu0 %v47
    %112 = vmatpush.msra.mxu0 %v43
    %113 = vmatpush.msra.mxu0 %v39
    %114 = vmatpush.msra.mxu0 %v35
    %115 = vmatpush.msra.mxu0 %v31
    %116 = vmatpush.msra.mxu0 %v27
    %117 = vmatpush.msra.mxu0 %v23
    %118 = vmatpush.msra.mxu0 %v19
    %119 = vmatmul.f32.gmra.mxu0 0.0
    %v120 = vpop.f32.mrf.mxu0
    %v121 = vadd.f32 0.0, %v120
    %122 = vdwg.mxu0
    %123 = vmatpush.msra.mxu0 %v80
    %124 = vmatpush.msra.mxu0 %v76
    %125 = vmatpush.msra.mxu0 %v72
    %126 = vmatpush.msra.mxu0 %v68
    %127 = vmatpush.msra.mxu0 %v64
    %128 = vmatpush.msra.mxu0 %v60
    %129 = vmatpush.msra.mxu0 %v56
    %130 = vmatpush.msra.mxu0 %v52
    %131 = vmatpush.msra.mxu0 %v48
    %132 = vmatpush.msra.mxu0 %v44
    %133 = vmatpush.msra.mxu0 %v40
    %134 = vmatpush.msra.mxu0 %v36
    %135 = vmatpush.msra.mxu0 %v32
    %136 = vmatpush.msra.mxu0 %v28
    %137 = vmatpush.msra.mxu0 %v24
    %138 = vmatpush.msra.mxu0 %v20
    %139 = vmatmul.f32.gmra.mxu0 0.0
    %v140 = vpop.f32.mrf.mxu0
    %v141 = vadd.f32 0.0, %v140
    %142 = vdwg.mxu0
    %143 = vmatpush.msra.mxu0 %v81
    %144 = vmatpush.msra.mxu0 %v77
    %145 = vmatpush.msra.mxu0 %v73
    %146 = vmatpush.msra.mxu0 %v69
    %147 = vmatpush.msra.mxu0 %v65
    %148 = vmatpush.msra.mxu0 %v61
    %149 = vmatpush.msra.mxu0 %v57
    %150 = vmatpush.msra.mxu0 %v53
    %151 = vmatpush.msra.mxu0 %v49
    %152 = vmatpush.msra.mxu0 %v45
    %153 = vmatpush.msra.mxu0 %v41
    %154 = vmatpush.msra.mxu0 %v37
    %155 = vmatpush.msra.mxu0 %v33
    %156 = vmatpush.msra.mxu0 %v29
    %157 = vmatpush.msra.mxu0 %v25
    %158 = vmatpush.msra.mxu0 %v21
    %159 = vmatmul.f32.gmra.mxu0 0.0
    %v160 = vpop.f32.mrf.mxu0
    %v161 = vadd.f32 0.0, %v160
    %162 = vdwg.mxu0
    %v167 = vrot.slane %v121, 7
    %v168 = vrot.slane %v141, 6
    %v169 = vrot.slane %v161, 5
    %vm170 = vcmask 1040384
    %v171 = vsel %vm170, %v101, %v167
    %vm172 = vcmask 1042434
    %v173 = vsel %vm172, %v168, %v169
    %vm174 = vcmask 1041408
    %v175 = vsel %vm174, %v171, %v173
    %v177 = vadd.f32 %v82, %v175
    %v178 = vsub.f32 0.0, %v177
    %v179 = vmul.f32 %v178, 1.442695
    %v180 = vpow.pop %v179
    %v181 = vadd.f32 %v180, 1.0
    %v182 = vrcp.pop %v181
    %v183 = vmul.f32 %v181, %v182
    %v184 = vsub.f32 1.0, %v183
    %v185 = vmul.f32 %v182, %v184
    %v186 = vadd.f32 %v182, %v185
    %vm187 = vweird.f32 %v181
    %vm188 = vweird.f32 %v182
    %vm189 = vmor %vm187, %vm188
    %v190 = vsel %vm189, %v182, %v186
    %v191 = vand.u32 2147483647, %v181
    %vm192 = vcmp.eq.f32.partialorder %v191, 8.507059e+37
    %v193 = vand.u32 %v181, 2147483648
    %v194 = vor.u32 1.1754944e-38, %v193
    %v195 = vsel %vm192, %v194, %v190
    %v196 = vmul.f32 1.0, %v195
    %v198 = vrot.slane %v177, 3
    %v200 = vtanh.pop %v198
    %v202 = vrot.slane %v196, 1
    %v204 = vmul.f32 %v202, 0.0
    %v205 = vmul.f32 %v196, %v200
    %v206 = vadd.f32 %v204, %v205
    %v207 = vtanh.pop %v206
    %v208 = vrot.slane %v196, 2
    %v210 = vmul.f32 %v208, %v207
    %s211 = scalar_lea.vmem %s0, 1
    %v212 = vld [vmem:[%s211] ss:$2 sm:$0xf]
    %213 = vmatpush.msra.mxu0 %v78
    %214 = vmatpush.msra.mxu0 %v74
    %215 = vmatpush.msra.mxu0 %v70
    %216 = vmatpush.msra.mxu0 %v66
    %217 = vmatpush.msra.mxu0 %v62
    %218 = vmatpush.msra.mxu0 %v58
    %219 = vmatpush.msra.mxu0 %v54
    %220 = vmatpush.msra.mxu0 %v50
    %221 = vmatpush.msra.mxu0 %v46
    %222 = vmatpush.msra.mxu0 %v42
    %223 = vmatpush.msra.mxu0 %v38
    %224 = vmatpush.msra.mxu0 %v34
    %225 = vmatpush.msra.mxu0 %v30
    %226 = vmatpush.msra.mxu0 %v26
    %227 = vmatpush.msra.mxu0 %v22
    %228 = vmatpush.msra.mxu0 %v18
    %229 = vmatmul.f32.gmra.mxu0 %v210
    %v230 = vpop.f32.mrf.mxu0
    %v231 = vadd.f32 0.0, %v230
    %232 = vdwg.mxu0
    %233 = vmatpush.msra.mxu0 %v79
    %234 = vmatpush.msra.mxu0 %v75
    %235 = vmatpush.msra.mxu0 %v71
    %236 = vmatpush.msra.mxu0 %v67
    %237 = vmatpush.msra.mxu0 %v63
    %238 = vmatpush.msra.mxu0 %v59
    %239 = vmatpush.msra.mxu0 %v55
    %240 = vmatpush.msra.mxu0 %v51
    %241 = vmatpush.msra.mxu0 %v47
    %242 = vmatpush.msra.mxu0 %v43
    %243 = vmatpush.msra.mxu0 %v39
    %244 = vmatpush.msra.mxu0 %v35
    %245 = vmatpush.msra.mxu0 %v31
    %246 = vmatpush.msra.mxu0 %v27
    %247 = vmatpush.msra.mxu0 %v23
    %248 = vmatpush.msra.mxu0 %v19
    %249 = vmatmul.f32.gmra.mxu0 %v210
    %v250 = vpop.f32.mrf.mxu0
    %v251 = vadd.f32 0.0, %v250
    %252 = vdwg.mxu0
    %253 = vmatpush.msra.mxu0 %v80
    %254 = vmatpush.msra.mxu0 %v76
    %255 = vmatpush.msra.mxu0 %v72
    %256 = vmatpush.msra.mxu0 %v68
    %257 = vmatpush.msra.mxu0 %v64
    %258 = vmatpush.msra.mxu0 %v60
    %259 = vmatpush.msra.mxu0 %v56
    %260 = vmatpush.msra.mxu0 %v52
    %261 = vmatpush.msra.mxu0 %v48
    %262 = vmatpush.msra.mxu0 %v44
    %263 = vmatpush.msra.mxu0 %v40
    %264 = vmatpush.msra.mxu0 %v36
    %265 = vmatpush.msra.mxu0 %v32
    %266 = vmatpush.msra.mxu0 %v28
    %267 = vmatpush.msra.mxu0 %v24
    %268 = vmatpush.msra.mxu0 %v20
    %269 = vmatmul.f32.gmra.mxu0 %v210
    %v270 = vpop.f32.mrf.mxu0
    %v271 = vadd.f32 0.0, %v270
    %272 = vdwg.mxu0
    %273 = vmatpush.msra.mxu0 %v81
    %274 = vmatpush.msra.mxu0 %v77
    %275 = vmatpush.msra.mxu0 %v73
    %276 = vmatpush.msra.mxu0 %v69
    %277 = vmatpush.msra.mxu0 %v65
    %278 = vmatpush.msra.mxu0 %v61
    %279 = vmatpush.msra.mxu0 %v57
    %280 = vmatpush.msra.mxu0 %v53
    %281 = vmatpush.msra.mxu0 %v49
    %282 = vmatpush.msra.mxu0 %v45
    %283 = vmatpush.msra.mxu0 %v41
    %284 = vmatpush.msra.mxu0 %v37
    %285 = vmatpush.msra.mxu0 %v33
    %286 = vmatpush.msra.mxu0 %v29
    %287 = vmatpush.msra.mxu0 %v25
    %288 = vmatpush.msra.mxu0 %v21
    %289 = vmatmul.f32.gmra.mxu0 %v210
    %v290 = vpop.f32.mrf.mxu0
    %v291 = vadd.f32 0.0, %v290
    %292 = vdwg.mxu0
    %v297 = vrot.slane %v251, 7
    %v298 = vrot.slane %v271, 6
    %v299 = vrot.slane %v291, 5
    %v300 = vsel %vm170, %v231, %v297
    %v301 = vsel %vm172, %v298, %v299
    %v302 = vsel %vm174, %v300, %v301
    %v304 = vadd.f32 %v212, %v302
    %v305 = vsub.f32 0.0, %v304
    %v306 = vmul.f32 %v305, 1.442695
    %v307 = vpow.pop %v306
    %v308 = vadd.f32 %v307, 1.0
    %v309 = vrcp.pop %v308
    %v310 = vmul.f32 %v308, %v309
    %v311 = vsub.f32 1.0, %v310
    %v312 = vmul.f32 %v309, %v311
    %v313 = vadd.f32 %v309, %v312
    %vm314 = vweird.f32 %v308
    %vm315 = vweird.f32 %v309
    %vm316 = vmor %vm314, %vm315
    %v317 = vsel %vm316, %v309, %v313
    %v318 = vand.u32 2147483647, %v308
    %vm319 = vcmp.eq.f32.partialorder %v318, 8.507059e+37
    %v320 = vand.u32 %v308, 2147483648
    %v321 = vor.u32 1.1754944e-38, %v320
    %v322 = vsel %vm319, %v321, %v317
    %v323 = vmul.f32 1.0, %v322
    %v325 = vrot.slane %v304, 3
    %v327 = vtanh.pop %v325
    %v329 = vrot.slane %v323, 1
    %v331 = vmul.f32 %v329, %v206
    %v332 = vmul.f32 %v323, %v327
    %v333 = vadd.f32 %v331, %v332
    %v334 = vtanh.pop %v333
    %v335 = vrot.slane %v323, 2
    %v337 = vmul.f32 %v335, %v334
    %v339 = vperm.slane %v337, 0
    %v341 = vsel %vm170, %v210, %v339
    %v342 = vld [vmem:[%s3] sm:$0x1]
    %v343 = vld [vmem:[%s2] sm:$0xff]
    %v344 = vld [vmem:[%s2 + $0x8] sm:$0xff]
    %v345 = vld [vmem:[%s2 + $0x10] sm:$0xff]
    %v346 = vld [vmem:[%s2 + $0x18] sm:$0xff]
    %v347 = vld [vmem:[%s2 + $0x20] sm:$0xff]
    %v348 = vld [vmem:[%s2 + $0x28] sm:$0xff]
    %v349 = vld [vmem:[%s2 + $0x30] sm:$0xff]
    %v350 = vld [vmem:[%s2 + $0x38] sm:$0xff]
    %v351 = vld [vmem:[%s2 + $0x40] sm:$0xff]
    %v352 = vld [vmem:[%s2 + $0x48] sm:$0xff]
    %v353 = vld [vmem:[%s2 + $0x50] sm:$0xff]
    %v354 = vld [vmem:[%s2 + $0x58] sm:$0xff]
    %v355 = vld [vmem:[%s2 + $0x60] sm:$0xff]
    %v356 = vld [vmem:[%s2 + $0x68] sm:$0xff]
    %v357 = vld [vmem:[%s2 + $0x70] sm:$0xff]
    %v358 = vld [vmem:[%s2 + $0x78] sm:$0xff]
    %359 = vmatpush.msra.mxu0 %v358
    %360 = vmatpush.msra.mxu0 %v357
    %361 = vmatpush.msra.mxu0 %v356
    %362 = vmatpush.msra.mxu0 %v355
    %363 = vmatpush.msra.mxu0 %v354
    %364 = vmatpush.msra.mxu0 %v353
    %365 = vmatpush.msra.mxu0 %v352
    %366 = vmatpush.msra.mxu0 %v351
    %367 = vmatpush.msra.mxu0 %v350
    %368 = vmatpush.msra.mxu0 %v349
    %369 = vmatpush.msra.mxu0 %v348
    %370 = vmatpush.msra.mxu0 %v347
    %371 = vmatpush.msra.mxu0 %v346
    %372 = vmatpush.msra.mxu0 %v345
    %373 = vmatpush.msra.mxu0 %v344
    %374 = vmatpush.msra.mxu0 %v343
    %375 = vmatmul.f32.gmra.mxu0 %v341
    %v376 = vpop.f32.mrf.mxu0
    %v377 = vadd.f32 0.0, %v376
    %378 = vdwg.mxu0
    %v380 = vperm.slane %v342, 0
    %v382 = vadd.f32 %v380, %v377
    %vm383 = vcmask 9216
    %384 = vst.msk [vmem:[#allocation2] sm:$0x3] %vm383, %v382
    // Predicated region
    $region18: #{double_lstm_forward.3} parent=1 // pred_check
      _
    $region19: #{double_lstm_forward.3} parent=1 // pred_check_branch
      %386 = sbr.rel (0) target = $region21
    $region20: #{double_lstm_forward.3} parent=1 // pred_region
      %388 = vsyncadd [#allocation3], 0
      %s390 = sshll.u32 [#allocation2], 4
      %s391 = int_to_ptr.vmem [resolvable:$true] %s390
      %s392 = sshll.u32 %s4, 4
      %s393 = int_to_ptr.hbm [resolvable:$true] %s392
      %395 = dma.vmem_to_hbm [thread:$0]  %s391, 32, %s393, [#allocation3]
    $region21: #{double_lstm_forward.3} parent=1 // pred_fallthru
      _
    // Predicated region
    $region22: #{double_lstm_forward.3} parent=1 // pred_check
      _
    $region23: #{double_lstm_forward.3} parent=1 // pred_check_branch
      %397 = sbr.rel (0) target = $region25
    $region24: #{double_lstm_forward.3} parent=1 // pred_region
      %399 = dma.done [#allocation3], 32
    $region25: #{double_lstm_forward.3} parent=1 // pred_fallthru
      _
    %400 = vsyncpa [#allocation3], 1

// kernel: double_lstm_forward.2
$region0: #{double_lstm_forward.2}
  #allocation0 [shape = 'u32[]', space=smem, size = 0x4, offset = 0x4, fixed_abs, tag = 'smem constant byte address 0x4 - core index']
  #allocation1 [shape = 'u32[72,128]{1,0:T(1,128)}', space=vmem, size = 0x9000, scoped, tag = 'internal scratch']
  %s0 = inlined_call_operand.vmem [shape: f32[16,512], index: 0, kind: input, shape index: {}]
  %s1 = inlined_call_operand.vmem [shape: f32[8,32], index: 1, kind: input, shape index: {}]
  %s2 = inlined_call_operand.vmem [shape: f32[16,128], index: 2, kind: output, shape index: {}]
  %s3 = sld [smem:[#allocation0]]
  $region18: #{double_lstm_forward.2} parent=0
    _
  %s5 = ssub.s32 1, %s3
  %s6 = scalar_select 0, %s5, %s3
  // Predicated region
  $region2: #{double_lstm_forward.2} parent=0 // pred_check
    _
  $region3: #{double_lstm_forward.2} parent=0 // pred_check_branch
    %8 = sbr.rel (0) target = $region5
  $region4: #{double_lstm_forward.2} parent=0 // pred_region
    _
  $region5: #{double_lstm_forward.2} parent=0 // pred_fallthru
    _
  // Predicated region
  $region6: #{double_lstm_forward.2} parent=0 // pred_check
    _
  $region7: #{double_lstm_forward.2} parent=0 // pred_check_branch
    %10 = sbr.rel (0) target = $region9
  $region8: #{double_lstm_forward.2} parent=0 // pred_region
    _
  $region9: #{double_lstm_forward.2} parent=0 // pred_fallthru
    _
  %v11 = vld [vmem:[%s1] sm:$0xff]
  %v12 = vld [vmem:[%s0] sm:$0xff]
  %v13 = vld [vmem:[%s0 + $0x20] sm:$0xff]
  %vm14 = vcmask 64512
  %v16 = vsel %vm14, 0.0, 0
  %18 = vmatpush.msra.mxu0 0.0
  %19 = vmatpush.msra.mxu0 0.0
  %20 = vmatpush.msra.mxu0 0.0
  %21 = vmatpush.msra.mxu0 0.0
  %22 = vmatpush.msra.mxu0 0.0
  %23 = vmatpush.msra.mxu0 0.0
  %24 = vmatpush.msra.mxu0 0.0
  %25 = vmatpush.msra.mxu0 0.0
  %26 = vmatpush.msra.mxu0 0.0
  %27 = vmatpush.msra.mxu0 0.0
  %28 = vmatpush.msra.mxu0 0.0
  %29 = vmatpush.msra.mxu0 0.0
  %30 = vmatpush.msra.mxu0 0.0
  %31 = vmatpush.msra.mxu0 0.0
  %32 = vmatpush.msra.mxu0 0.0
  %33 = vmatpush.msra.mxu0 %v11
  %34 = vmatmul.f32.gmra.mxu0 %v16
  %v35 = vpop.f32.mrf.mxu0
  %v36 = vadd.f32 0.0, %v35
  %37 = vmatmul.f32.gmra.mxu0 %v16
  %v38 = vpop.f32.mrf.mxu0
  %v39 = vadd.f32 0.0, %v38
  %40 = vdwg.mxu0
  %v41 = vadd.f32 %v12, %v36
  %v42 = vadd.f32 %v13, %v39
  %v43 = vsub.f32 0.0, %v41
  %v44 = vsub.f32 0.0, %v42
  %v45 = vmul.f32 %v43, 1.442695
  %v46 = vpow.pop %v45
  %v47 = vmul.f32 %v44, 1.442695
  %v48 = vpow.pop %v47
  %v49 = vadd.f32 %v46, 1.0
  %v50 = vadd.f32 %v48, 1.0
  %v51 = vrcp.pop %v49
  %v52 = vmul.f32 %v49, %v51
  %v53 = vsub.f32 1.0, %v52
  %v54 = vmul.f32 %v51, %v53
  %v55 = vadd.f32 %v51, %v54
  %vm56 = vweird.f32 %v49
  %vm57 = vweird.f32 %v51
  %vm58 = vmor %vm56, %vm57
  %v59 = vsel %vm58, %v51, %v55
  %v60 = vand.u32 2147483647, %v49
  %vm61 = vcmp.eq.f32.partialorder %v60, 8.507059e+37
  %v62 = vand.u32 %v49, 2147483648
  %v63 = vor.u32 1.1754944e-38, %v62
  %v64 = vsel %vm61, %v63, %v59
  %v65 = vmul.f32 1.0, %v64
  %v66 = vrcp.pop %v50
  %v67 = vmul.f32 %v50, %v66
  %v68 = vsub.f32 1.0, %v67
  %v69 = vmul.f32 %v66, %v68
  %v70 = vadd.f32 %v66, %v69
  %vm71 = vweird.f32 %v50
  %vm72 = vweird.f32 %v66
  %vm73 = vmor %vm71, %vm72
  %v74 = vsel %vm73, %v66, %v70
  %v75 = vand.u32 2147483647, %v50
  %vm76 = vcmp.eq.f32.partialorder %v75, 8.507059e+37
  %v77 = vand.u32 %v50, 2147483648
  %v78 = vor.u32 1.1754944e-38, %v77
  %v79 = vsel %vm76, %v78, %v74
  %v80 = vmul.f32 1.0, %v79
  %v81 = vtanh.pop %v41
  %v82 = vtanh.pop %v42
  %v83 = vmul.f32 %v65, 0.0
  %v84 = vmul.f32 %v80, 0.0
  %87 = vrot.lane.b32.xlu0 %v81, 104
  %v88 = vpop.permute.xlu0 %87
  %89 = vrot.lane.b32.xlu0 %v82, 104
  %v90 = vpop.permute.xlu0 %89
  %v93 = vmul.f32 %v65, %v88
  %v94 = vmul.f32 %v80, %v90
  %97 = vrot.lane.b32.xlu0 %v93, 8
  %v98 = vpop.permute.xlu0 %97
  %99 = vrot.lane.b32.xlu0 %v94, 8
  %v100 = vpop.permute.xlu0 %99
  %v103 = vadd.f32 %v83, %v98
  %v104 = vadd.f32 %v84, %v100
  %v105 = vtanh.pop %v103
  %v106 = vtanh.pop %v104
  %109 = vrot.lane.b32.xlu0 %v105, 8
  %v110 = vpop.permute.xlu0 %109
  %111 = vrot.lane.b32.xlu0 %v106, 8
  %v112 = vpop.permute.xlu0 %111
  %v115 = vmul.f32 %v65, %v110
  %v116 = vmul.f32 %v80, %v112
  %119 = vrot.lane.b32.xlu0 %v115, 112
  %v120 = vpop.permute.xlu0 %119
  %121 = vrot.lane.b32.xlu0 %v116, 112
  %v122 = vpop.permute.xlu0 %121
  %125 = vst.msk [vmem:[%s2] sm:$0xff] %vm14, %v120
  %126 = vst.msk [vmem:[%s2 + $0x8] sm:$0xff] %vm14, %v122
  %v127 = vld [vmem:[%s0] sm:$0xff]
  %v128 = vld [vmem:[%s0 + $0x20] sm:$0xff]
  %v129 = vsel %vm14, %v120, 0
  %v131 = vsel %vm14, %v122, 0
  %133 = vmatpush.msra.mxu0 0.0
  %134 = vmatpush.msra.mxu0 0.0
  %135 = vmatpush.msra.mxu0 0.0
  %136 = vmatpush.msra.mxu0 0.0
  %137 = vmatpush.msra.mxu0 0.0
  %138 = vmatpush.msra.mxu0 0.0
  %139 = vmatpush.msra.mxu0 0.0
  %140 = vmatpush.msra.mxu0 0.0
  %141 = vmatpush.msra.mxu0 0.0
  %142 = vmatpush.msra.mxu0 0.0
  %143 = vmatpush.msra.mxu0 0.0
  %144 = vmatpush.msra.mxu0 0.0
  %145 = vmatpush.msra.mxu0 0.0
  %146 = vmatpush.msra.mxu0 0.0
  %147 = vmatpush.msra.mxu0 0.0
  %148 = vmatpush.msra.mxu0 %v11
  %149 = vmatmul.f32.gmra.mxu0 %v129
  %v150 = vpop.f32.mrf.mxu0
  %v151 = vadd.f32 0.0, %v150
  %152 = vmatmul.f32.gmra.mxu0 %v131
  %v153 = vpop.f32.mrf.mxu0
  %v154 = vadd.f32 0.0, %v153
  %155 = vdwg.mxu0
  %158 = vrot.lane.b32.xlu0 %v151, 32
  %v159 = vpop.permute.xlu0 %158
  %160 = vrot.lane.b32.xlu0 %v154, 32
  %v161 = vpop.permute.xlu0 %160
  %v164 = vadd.f32 %v127, %v159
  %v165 = vadd.f32 %v128, %v161
  %v166 = vsub.f32 0.0, %v164
  %v167 = vsub.f32 0.0, %v165
  %v168 = vmul.f32 %v166, 1.442695
  %v169 = vpow.pop %v168
  %v170 = vmul.f32 %v167, 1.442695
  %v171 = vpow.pop %v170
  %v172 = vadd.f32 %v169, 1.0
  %v173 = vadd.f32 %v171, 1.0
  %v174 = vrcp.pop %v172
  %v175 = vmul.f32 %v172, %v174
  %v176 = vsub.f32 1.0, %v175
  %v177 = vmul.f32 %v174, %v176
  %v178 = vadd.f32 %v174, %v177
  %vm179 = vweird.f32 %v172
  %vm180 = vweird.f32 %v174
  %vm181 = vmor %vm179, %vm180
  %v182 = vsel %vm181, %v174, %v178
  %v183 = vand.u32 2147483647, %v172
  %vm184 = vcmp.eq.f32.partialorder %v183, 8.507059e+37
  %v185 = vand.u32 %v172, 2147483648
  %v186 = vor.u32 1.1754944e-38, %v185
  %v187 = vsel %vm184, %v186, %v182
  %v188 = vmul.f32 1.0, %v187
  %v189 = vrcp.pop %v173
  %v190 = vmul.f32 %v173, %v189
  %v191 = vsub.f32 1.0, %v190
  %v192 = vmul.f32 %v189, %v191
  %v193 = vadd.f32 %v189, %v192
  %vm194 = vweird.f32 %v173
  %vm195 = vweird.f32 %v189
  %vm196 = vmor %vm194, %vm195
  %v197 = vsel %vm196, %v189, %v193
  %v198 = vand.u32 2147483647, %v173
  %vm199 = vcmp.eq.f32.partialorder %v198, 8.507059e+37
  %v200 = vand.u32 %v173, 2147483648
  %v201 = vor.u32 1.1754944e-38, %v200
  %v202 = vsel %vm199, %v201, %v197
  %v203 = vmul.f32 1.0, %v202
  %v204 = vtanh.pop %v164
  %v205 = vtanh.pop %v165
  %208 = vrot.lane.b32.xlu0 %v103, 32
  %v209 = vpop.permute.xlu0 %208
  %210 = vrot.lane.b32.xlu0 %v104, 32
  %v211 = vpop.permute.xlu0 %210
  %v214 = vmul.f32 %v188, %v209
  %v215 = vmul.f32 %v203, %v211
  %218 = vrot.lane.b32.xlu0 %v204, 104
  %v219 = vpop.permute.xlu0 %218
  %220 = vrot.lane.b32.xlu0 %v205, 104
  %v221 = vpop.permute.xlu0 %220
  %v224 = vmul.f32 %v188, %v219
  %v225 = vmul.f32 %v203, %v221
  %228 = vrot.lane.b32.xlu0 %v224, 8
  %v229 = vpop.permute.xlu0 %228
  %230 = vrot.lane.b32.xlu0 %v225, 8
  %v231 = vpop.permute.xlu0 %230
  %v234 = vadd.f32 %v214, %v229
  %v235 = vadd.f32 %v215, %v231
  %v236 = vtanh.pop %v234
  %v237 = vtanh.pop %v235
  %240 = vrot.lane.b32.xlu0 %v236, 8
  %v241 = vpop.permute.xlu0 %240
  %242 = vrot.lane.b32.xlu0 %v237, 8
  %v243 = vpop.permute.xlu0 %242
  %v246 = vmul.f32 %v188, %v241
  %v247 = vmul.f32 %v203, %v243
  %250 = vrot.lane.b32.xlu0 %v246, 88
  %v251 = vpop.permute.xlu0 %250
  %252 = vrot.lane.b32.xlu0 %v247, 88
  %v253 = vpop.permute.xlu0 %252
  %vm256 = vcmask 130112
  %257 = vst.msk [vmem:[%s2] sm:$0xff] %vm256, %v251
  %258 = vst.msk [vmem:[%s2 + $0x8] sm:$0xff] %vm256, %v253
  %v259 = vld [vmem:[%s0] sm:$0xff]
  %v260 = vld [vmem:[%s0 + $0x20] sm:$0xff]
  %261 = vrot.lane.b32.xlu0 %v246, 80
  %v262 = vpop.permute.xlu0 %261
  %263 = vrot.lane.b32.xlu0 %v247, 80
  %v264 = vpop.permute.xlu0 %263
  %v265 = vsel %vm14, %v262, 0
  %v267 = vsel %vm14, %v264, 0
  %269 = vmatpush.msra.mxu0 0.0
  %270 = vmatpush.msra.mxu0 0.0
  %271 = vmatpush.msra.mxu0 0.0
  %272 = vmatpush.msra.mxu0 0.0
  %273 = vmatpush.msra.mxu0 0.0
  %274 = vmatpush.msra.mxu0 0.0
  %275 = vmatpush.msra.mxu0 0.0
  %276 = vmatpush.msra.mxu0 0.0
  %277 = vmatpush.msra.mxu0 0.0
  %278 = vmatpush.msra.mxu0 0.0
  %279 = vmatpush.msra.mxu0 0.0
  %280 = vmatpush.msra.mxu0 0.0
  %281 = vmatpush.msra.mxu0 0.0
  %282 = vmatpush.msra.mxu0 0.0
  %283 = vmatpush.msra.mxu0 0.0
  %284 = vmatpush.msra.mxu0 %v11
  %285 = vmatmul.f32.gmra.mxu0 %v265
  %v286 = vpop.f32.mrf.mxu0
  %v287 = vadd.f32 0.0, %v286
  %288 = vmatmul.f32.gmra.mxu0 %v267
  %v289 = vpop.f32.mrf.mxu0
  %v290 = vadd.f32 0.0, %v289
  %291 = vdwg.mxu0
  %294 = vrot.lane.b32.xlu0 %v287, 64
  %v295 = vpop.permute.xlu0 %294
  %296 = vrot.lane.b32.xlu0 %v290, 64
  %v297 = vpop.permute.xlu0 %296
  %v300 = vadd.f32 %v259, %v295
  %v301 = vadd.f32 %v260, %v297
  %v302 = vsub.f32 0.0, %v300
  %v303 = vsub.f32 0.0, %v301
  %v304 = vmul.f32 %v302, 1.442695
  %v305 = vpow.pop %v304
  %v306 = vmul.f32 %v303, 1.442695
  %v307 = vpow.pop %v306
  %v308 = vadd.f32 %v305, 1.0
  %v309 = vadd.f32 %v307, 1.0
  %v310 = vrcp.pop %v308
  %v311 = vmul.f32 %v308, %v310
  %v312 = vsub.f32 1.0, %v311
  %v313 = vmul.f32 %v310, %v312
  %v314 = vadd.f32 %v310, %v313
  %vm315 = vweird.f32 %v308
  %vm316 = vweird.f32 %v310
  %vm317 = vmor %vm315, %vm316
  %v318 = vsel %vm317, %v310, %v314
  %v319 = vand.u32 2147483647, %v308
  %vm320 = vcmp.eq.f32.partialorder %v319, 8.507059e+37
  %v321 = vand.u32 %v308, 2147483648
  %v322 = vor.u32 1.1754944e-38, %v321
  %v323 = vsel %vm320, %v322, %v318
  %v324 = vmul.f32 1.0, %v323
  %v325 = vrcp.pop %v309
  %v326 = vmul.f32 %v309, %v325
  %v327 = vsub.f32 1.0, %v326
  %v328 = vmul.f32 %v325, %v327
  %v329 = vadd.f32 %v325, %v328
  %vm330 = vweird.f32 %v309
  %vm331 = vweird.f32 %v325
  %vm332 = vmor %vm330, %vm331
  %v333 = vsel %vm332, %v325, %v329
  %v334 = vand.u32 2147483647, %v309
  %vm335 = vcmp.eq.f32.partialorder %v334, 8.507059e+37
  %v336 = vand.u32 %v309, 2147483648
  %v337 = vor.u32 1.1754944e-38, %v336
  %v338 = vsel %vm335, %v337, %v333
  %v339 = vmul.f32 1.0, %v338
  %v340 = vtanh.pop %v300
  %v341 = vtanh.pop %v301
  %344 = vrot.lane.b32.xlu0 %v234, 32
  %v345 = vpop.permute.xlu0 %344
  %346 = vrot.lane.b32.xlu0 %v235, 32
  %v347 = vpop.permute.xlu0 %346
  %v350 = vmul.f32 %v324, %v345
  %v351 = vmul.f32 %v339, %v347
  %354 = vrot.lane.b32.xlu0 %v340, 104
  %v355 = vpop.permute.xlu0 %354
  %356 = vrot.lane.b32.xlu0 %v341, 104
  %v357 = vpop.permute.xlu0 %356
  %v360 = vmul.f32 %v324, %v355
  %v361 = vmul.f32 %v339, %v357
  %364 = vrot.lane.b32.xlu0 %v360, 8
  %v365 = vpop.permute.xlu0 %364
  %366 = vrot.lane.b32.xlu0 %v361, 8
  %v367 = vpop.permute.xlu0 %366
  %v370 = vadd.f32 %v350, %v365
  %v371 = vadd.f32 %v351, %v367
  %v372 = vtanh.pop %v370
  %v373 = vtanh.pop %v371
  %376 = vrot.lane.b32.xlu0 %v372, 8
  %v377 = vpop.permute.xlu0 %376
  %378 = vrot.lane.b32.xlu0 %v373, 8
  %v379 = vpop.permute.xlu0 %378
  %v382 = vmul.f32 %v324, %v377
  %v383 = vmul.f32 %v339, %v379
  %386 = vrot.lane.b32.xlu0 %v382, 64
  %v387 = vpop.permute.xlu0 %386
  %388 = vrot.lane.b32.xlu0 %v383, 64
  %v389 = vpop.permute.xlu0 %388
  %vm392 = vcmask 195712
  %393 = vst.msk [vmem:[%s2] sm:$0xff] %vm392, %v387
  %394 = vst.msk [vmem:[%s2 + $0x8] sm:$0xff] %vm392, %v389
  %v395 = vld [vmem:[%s0] sm:$0xff]
  %v396 = vld [vmem:[%s0 + $0x20] sm:$0xff]
  %397 = vrot.lane.b32.xlu0 %v382, 48
  %v398 = vpop.permute.xlu0 %397
  %399 = vrot.lane.b32.xlu0 %v383, 48
  %v400 = vpop.permute.xlu0 %399
  %v401 = vsel %vm14, %v398, 0
  %v403 = vsel %vm14, %v400, 0
  %405 = vmatpush.msra.mxu0 0.0
  %406 = vmatpush.msra.mxu0 0.0
  %407 = vmatpush.msra.mxu0 0.0
  %408 = vmatpush.msra.mxu0 0.0
  %409 = vmatpush.msra.mxu0 0.0
  %410 = vmatpush.msra.mxu0 0.0
  %411 = vmatpush.msra.mxu0 0.0
  %412 = vmatpush.msra.mxu0 0.0
  %413 = vmatpush.msra.mxu0 0.0
  %414 = vmatpush.msra.mxu0 0.0
  %415 = vmatpush.msra.mxu0 0.0
  %416 = vmatpush.msra.mxu0 0.0
  %417 = vmatpush.msra.mxu0 0.0
  %418 = vmatpush.msra.mxu0 0.0
  %419 = vmatpush.msra.mxu0 0.0
  %420 = vmatpush.msra.mxu0 %v11
  %421 = vmatmul.f32.gmra.mxu0 %v401
  %v422 = vpop.f32.mrf.mxu0
  %v423 = vadd.f32 0.0, %v422
  %424 = vmatmul.f32.gmra.mxu0 %v403
  %v425 = vpop.f32.mrf.mxu0
  %v426 = vadd.f32 0.0, %v425
  %427 = vdwg.mxu0
  %430 = vrot.lane.b32.xlu0 %v423, 96
  %v431 = vpop.permute.xlu0 %430
  %432 = vrot.lane.b32.xlu0 %v426, 96
  %v433 = vpop.permute.xlu0 %432
  %v436 = vadd.f32 %v395, %v431
  %v437 = vadd.f32 %v396, %v433
  %v438 = vsub.f32 0.0, %v436
  %v439 = vsub.f32 0.0, %v437
  %v440 = vmul.f32 %v438, 1.442695
  %v441 = vpow.pop %v440
  %v442 = vmul.f32 %v439, 1.442695
  %v443 = vpow.pop %v442
  %v444 = vadd.f32 %v441, 1.0
  %v445 = vadd.f32 %v443, 1.0
  %v446 = vrcp.pop %v444
  %v447 = vmul.f32 %v444, %v446
  %v448 = vsub.f32 1.0, %v447
  %v449 = vmul.f32 %v446, %v448
  %v450 = vadd.f32 %v446, %v449
  %vm451 = vweird.f32 %v444
  %vm452 = vweird.f32 %v446
  %vm453 = vmor %vm451, %vm452
  %v454 = vsel %vm453, %v446, %v450
  %v455 = vand.u32 2147483647, %v444
  %vm456 = vcmp.eq.f32.partialorder %v455, 8.507059e+37
  %v457 = vand.u32 %v444, 2147483648
  %v458 = vor.u32 1.1754944e-38, %v457
  %v459 = vsel %vm456, %v458, %v454
  %v460 = vmul.f32 1.0, %v459
  %v461 = vrcp.pop %v445
  %v462 = vmul.f32 %v445, %v461
  %v463 = vsub.f32 1.0, %v462
  %v464 = vmul.f32 %v461, %v463
  %v465 = vadd.f32 %v461, %v464
  %vm466 = vweird.f32 %v445
  %vm467 = vweird.f32 %v461
  %vm468 = vmor %vm466, %vm467
  %v469 = vsel %vm468, %v461, %v465
  %v470 = vand.u32 2147483647, %v445
  %vm471 = vcmp.eq.f32.partialorder %v470, 8.507059e+37
  %v472 = vand.u32 %v445, 2147483648
  %v473 = vor.u32 1.1754944e-38, %v472
  %v474 = vsel %vm471, %v473, %v469
  %v475 = vmul.f32 1.0, %v474
  %v476 = vtanh.pop %v436
  %v477 = vtanh.pop %v437
  %480 = vrot.lane.b32.xlu0 %v370, 32
  %v481 = vpop.permute.xlu0 %480
  %482 = vrot.lane.b32.xlu0 %v371, 32
  %v483 = vpop.permute.xlu0 %482
  %v486 = vmul.f32 %v460, %v481
  %v487 = vmul.f32 %v475, %v483
  %490 = vrot.lane.b32.xlu0 %v476, 104
  %v491 = vpop.permute.xlu0 %490
  %492 = vrot.lane.b32.xlu0 %v477, 104
  %v493 = vpop.permute.xlu0 %492
  %v496 = vmul.f32 %v460, %v491
  %v497 = vmul.f32 %v475, %v493
  %500 = vrot.lane.b32.xlu0 %v496, 8
  %v501 = vpop.permute.xlu0 %500
  %502 = vrot.lane.b32.xlu0 %v497, 8
  %v503 = vpop.permute.xlu0 %502
  %v506 = vadd.f32 %v486, %v501
  %v507 = vadd.f32 %v487, %v503
  %v508 = vtanh.pop %v506
  %v509 = vtanh.pop %v507
  %512 = vrot.lane.b32.xlu0 %v508, 8
  %v513 = vpop.permute.xlu0 %512
  %514 = vrot.lane.b32.xlu0 %v509, 8
  %v515 = vpop.permute.xlu0 %514
  %v518 = vmul.f32 %v460, %v513
  %v519 = vmul.f32 %v475, %v515
  %522 = vrot.lane.b32.xlu0 %v518, 40
  %v523 = vpop.permute.xlu0 %522
  %524 = vrot.lane.b32.xlu0 %v519, 40
  %v525 = vpop.permute.xlu0 %524
  %vm528 = vcmask 261312
  %529 = vst.msk [vmem:[%s2] sm:$0xff] %vm528, %v523
  %530 = vst.msk [vmem:[%s2 + $0x8] sm:$0xff] %vm528, %v525
  %v531 = vld [vmem:[%s0 + $0x8] sm:$0xff]
  %v532 = vld [vmem:[%s0 + $0x28] sm:$0xff]
  %533 = vrot.lane.b32.xlu0 %v518, 16
  %v534 = vpop.permute.xlu0 %533
  %535 = vrot.lane.b32.xlu0 %v519, 16
  %v536 = vpop.permute.xlu0 %535
  %v537 = vsel %vm14, %v534, 0
  %v539 = vsel %vm14, %v536, 0
  %541 = vmatpush.msra.mxu0 0.0
  %542 = vmatpush.msra.mxu0 0.0
  %543 = vmatpush.msra.mxu0 0.0
  %544 = vmatpush.msra.mxu0 0.0
  %545 = vmatpush.msra.mxu0 0.0
  %546 = vmatpush.msra.mxu0 0.0
  %547 = vmatpush.msra.mxu0 0.0
  %548 = vmatpush.msra.mxu0 0.0
  %549 = vmatpush.msra.mxu0 0.0
  %550 = vmatpush.msra.mxu0 0.0
  %551 = vmatpush.msra.mxu0 0.0
  %552 = vmatpush.msra.mxu0 0.0
  %553 = vmatpush.msra.mxu0 0.0
  %554 = vmatpush.msra.mxu0 0.0
  %555 = vmatpush.msra.mxu0 0.0
  %556 = vmatpush.msra.mxu0 %v11
  %557 = vmatmul.f32.gmra.mxu0 %v537
  %v558 = vpop.f32.mrf.mxu0
  %v559 = vadd.f32 0.0, %v558
  %560 = vmatmul.f32.gmra.mxu0 %v539
  %v561 = vpop.f32.mrf.mxu0
  %v562 = vadd.f32 0.0, %v561
  %563 = vdwg.mxu0
  %v564 = vadd.f32 %v531, %v559
  %v565 = vadd.f32 %v532, %v562
  %v566 = vsub.f32 0.0, %v564
  %v567 = vsub.f32 0.0, %v565
  %v568 = vmul.f32 %v566, 1.442695
  %v569 = vpow.pop %v568
  %v570 = vmul.f32 %v567, 1.442695
  %v571 = vpow.pop %v570
  %v572 = vadd.f32 %v569, 1.0
  %v573 = vadd.f32 %v571, 1.0
  %v574 = vrcp.pop %v572
  %v575 = vmul.f32 %v572, %v574
  %v576 = vsub.f32 1.0, %v575
  %v577 = vmul.f32 %v574, %v576
  %v578 = vadd.f32 %v574, %v577
  %vm579 = vweird.f32 %v572
  %vm580 = vweird.f32 %v574
  %vm581 = vmor %vm579, %vm580
  %v582 = vsel %vm581, %v574, %v578
  %v583 = vand.u32 2147483647, %v572
  %vm584 = vcmp.eq.f32.partialorder %v583, 8.507059e+37
  %v585 = vand.u32 %v572, 2147483648
  %v586 = vor.u32 1.1754944e-38, %v585
  %v587 = vsel %vm584, %v586, %v582
  %v588 = vmul.f32 1.0, %v587
  %v589 = vrcp.pop %v573
  %v590 = vmul.f32 %v573, %v589
  %v591 = vsub.f32 1.0, %v590
  %v592 = vmul.f32 %v589, %v591
  %v593 = vadd.f32 %v589, %v592
  %vm594 = vweird.f32 %v573
  %vm595 = vweird.f32 %v589
  %vm596 = vmor %vm594, %vm595
  %v597 = vsel %vm596, %v589, %v593
  %v598 = vand.u32 2147483647, %v573
  %vm599 = vcmp.eq.f32.partialorder %v598, 8.507059e+37
  %v600 = vand.u32 %v573, 2147483648
  %v601 = vor.u32 1.1754944e-38, %v600
  %v602 = vsel %vm599, %v601, %v597
  %v603 = vmul.f32 1.0, %v602
  %v604 = vtanh.pop %v564
  %v605 = vtanh.pop %v565
  %608 = vrot.lane.b32.xlu0 %v506, 32
  %v609 = vpop.permute.xlu0 %608
  %610 = vrot.lane.b32.xlu0 %v507, 32
  %v611 = vpop.permute.xlu0 %610
  %v614 = vmul.f32 %v588, %v609
  %v615 = vmul.f32 %v603, %v611
  %618 = vrot.lane.b32.xlu0 %v604, 104
  %v619 = vpop.permute.xlu0 %618
  %620 = vrot.lane.b32.xlu0 %v605, 104
  %v621 = vpop.permute.xlu0 %620
  %v624 = vmul.f32 %v588, %v619
  %v625 = vmul.f32 %v603, %v621
  %628 = vrot.lane.b32.xlu0 %v624, 8
  %v629 = vpop.permute.xlu0 %628
  %630 = vrot.lane.b32.xlu0 %v625, 8
  %v631 = vpop.permute.xlu0 %630
  %v634 = vadd.f32 %v614, %v629
  %v635 = vadd.f32 %v615, %v631
  %v636 = vtanh.pop %v634
  %v637 = vtanh.pop %v635
  %640 = vrot.lane.b32.xlu0 %v636, 8
  %v641 = vpop.permute.xlu0 %640
  %642 = vrot.lane.b32.xlu0 %v637, 8
  %v643 = vpop.permute.xlu0 %642
  %v646 = vmul.f32 %v588, %v641
  %v647 = vmul.f32 %v603, %v643
  %650 = vrot.lane.b32.xlu0 %v646, 16
  %v651 = vpop.permute.xlu0 %650
  %652 = vrot.lane.b32.xlu0 %v647, 16
  %v653 = vpop.permute.xlu0 %652
  %vm656 = vcmask 326912
  %657 = vst.msk [vmem:[%s2] sm:$0xff] %vm656, %v651
  %658 = vst.msk [vmem:[%s2 + $0x8] sm:$0xff] %vm656, %v653
  %v659 = vld [vmem:[%s0 + $0x8] sm:$0xff]
  %v660 = vld [vmem:[%s0 + $0x28] sm:$0xff]
  %661 = vrot.lane.b32.xlu0 %v646, 112
  %v662 = vpop.permute.xlu0 %661
  %663 = vrot.lane.b32.xlu0 %v647, 112
  %v664 = vpop.permute.xlu0 %663
  %v665 = vsel %vm14, %v662, 0
  %v667 = vsel %vm14, %v664, 0
  %669 = vmatpush.msra.mxu0 0.0
  %670 = vmatpush.msra.mxu0 0.0
  %671 = vmatpush.msra.mxu0 0.0
  %672 = vmatpush.msra.mxu0 0.0
  %673 = vmatpush.msra.mxu0 0.0
  %674 = vmatpush.msra.mxu0 0.0
  %675 = vmatpush.msra.mxu0 0.0
  %676 = vmatpush.msra.mxu0 0.0
  %677 = vmatpush.msra.mxu0 0.0
  %678 = vmatpush.msra.mxu0 0.0
  %679 = vmatpush.msra.mxu0 0.0
  %680 = vmatpush.msra.mxu0 0.0
  %681 = vmatpush.msra.mxu0 0.0
  %682 = vmatpush.msra.mxu0 0.0
  %683 = vmatpush.msra.mxu0 0.0
  %684 = vmatpush.msra.mxu0 %v11
  %685 = vmatmul.f32.gmra.mxu0 %v665
  %v686 = vpop.f32.mrf.mxu0
  %v687 = vadd.f32 0.0, %v686
  %688 = vmatmul.f32.gmra.mxu0 %v667
  %v689 = vpop.f32.mrf.mxu0
  %v690 = vadd.f32 0.0, %v689
  %691 = vdwg.mxu0
  %694 = vrot.lane.b32.xlu0 %v687, 32
  %v695 = vpop.permute.xlu0 %694
  %696 = vrot.lane.b32.xlu0 %v690, 32
  %v697 = vpop.permute.xlu0 %696
  %v700 = vadd.f32 %v659, %v695
  %v701 = vadd.f32 %v660, %v697
  %v702 = vsub.f32 0.0, %v700
  %v703 = vsub.f32 0.0, %v701
  %v704 = vmul.f32 %v702, 1.442695
  %v705 = vpow.pop %v704
  %v706 = vmul.f32 %v703, 1.442695
  %v707 = vpow.pop %v706
  %v708 = vadd.f32 %v705, 1.0
  %v709 = vadd.f32 %v707, 1.0
  %v710 = vrcp.pop %v708
  %v711 = vmul.f32 %v708, %v710
  %v712 = vsub.f32 1.0, %v711
  %v713 = vmul.f32 %v710, %v712
  %v714 = vadd.f32 %v710, %v713
  %vm715 = vweird.f32 %v708
  %vm716 = vweird.f32 %v710
  %vm717 = vmor %vm715, %vm716
  %v718 = vsel %vm717, %v710, %v714
  %v719 = vand.u32 2147483647, %v708
  %vm720 = vcmp.eq.f32.partialorder %v719, 8.507059e+37
  %v721 = vand.u32 %v708, 2147483648
  %v722 = vor.u32 1.1754944e-38, %v721
  %v723 = vsel %vm720, %v722, %v718
  %v724 = vmul.f32 1.0, %v723
  %v725 = vrcp.pop %v709
  %v726 = vmul.f32 %v709, %v725
  %v727 = vsub.f32 1.0, %v726
  %v728 = vmul.f32 %v725, %v727
  %v729 = vadd.f32 %v725, %v728
  %vm730 = vweird.f32 %v709
  %vm731 = vweird.f32 %v725
  %vm732 = vmor %vm730, %vm731
  %v733 = vsel %vm732, %v725, %v729
  %v734 = vand.u32 2147483647, %v709
  %vm735 = vcmp.eq.f32.partialorder %v734, 8.507059e+37
  %v736 = vand.u32 %v709, 2147483648
  %v737 = vor.u32 1.1754944e-38, %v736
  %v738 = vsel %vm735, %v737, %v733
  %v739 = vmul.f32 1.0, %v738
  %v740 = vtanh.pop %v700
  %v741 = vtanh.pop %v701
  %744 = vrot.lane.b32.xlu0 %v634, 32
  %v745 = vpop.permute.xlu0 %744
  %746 = vrot.lane.b32.xlu0 %v635, 32
  %v747 = vpop.permute.xlu0 %746
  %v750 = vmul.f32 %v724, %v745
  %v751 = vmul.f32 %v739, %v747
  %754 = vrot.lane.b32.xlu0 %v740, 104
  %v755 = vpop.permute.xlu0 %754
  %756 = vrot.lane.b32.xlu0 %v741, 104
  %v757 = vpop.permute.xlu0 %756
  %v760 = vmul.f32 %v724, %v755
  %v761 = vmul.f32 %v739, %v757
  %764 = vrot.lane.b32.xlu0 %v760, 8
  %v765 = vpop.permute.xlu0 %764
  %766 = vrot.lane.b32.xlu0 %v761, 8
  %v767 = vpop.permute.xlu0 %766
  %v770 = vadd.f32 %v750, %v765
  %v771 = vadd.f32 %v751, %v767
  %v772 = vtanh.pop %v770
  %v773 = vtanh.pop %v771
  %776 = vrot.lane.b32.xlu0 %v772, 8
  %v777 = vpop.permute.xlu0 %776
  %778 = vrot.lane.b32.xlu0 %v773, 8
  %v779 = vpop.permute.xlu0 %778
  %v782 = vmul.f32 %v724, %v777
  %v783 = vmul.f32 %v739, %v779
  %786 = vrot.lane.b32.xlu0 %v782, 120
  %v787 = vpop.permute.xlu0 %786
  %788 = vrot.lane.b32.xlu0 %v783, 120
  %v789 = vpop.permute.xlu0 %788
  %vm792 = vcmask 392512
  %793 = vst.msk [vmem:[%s2] sm:$0xff] %vm792, %v787
  %794 = vst.msk [vmem:[%s2 + $0x8] sm:$0xff] %vm792, %v789
  %v795 = vld [vmem:[%s0 + $0x8] sm:$0xff]
  %v796 = vld [vmem:[%s0 + $0x28] sm:$0xff]
  %797 = vrot.lane.b32.xlu0 %v782, 80
  %v798 = vpop.permute.xlu0 %797
  %799 = vrot.lane.b32.xlu0 %v783, 80
  %v800 = vpop.permute.xlu0 %799
  %v801 = vsel %vm14, %v798, 0
  %v803 = vsel %vm14, %v800, 0
  %805 = vmatpush.msra.mxu0 0.0
  %806 = vmatpush.msra.mxu0 0.0
  %807 = vmatpush.msra.mxu0 0.0
  %808 = vmatpush.msra.mxu0 0.0
  %809 = vmatpush.msra.mxu0 0.0
  %810 = vmatpush.msra.mxu0 0.0
  %811 = vmatpush.msra.mxu0 0.0
  %812 = vmatpush.msra.mxu0 0.0
  %813 = vmatpush.msra.mxu0 0.0
  %814 = vmatpush.msra.mxu0 0.0
  %815 = vmatpush.msra.mxu0 0.0
  %816 = vmatpush.msra.mxu0 0.0
  %817 = vmatpush.msra.mxu0 0.0
  %818 = vmatpush.msra.mxu0 0.0
  %819 = vmatpush.msra.mxu0 0.0
  %820 = vmatpush.msra.mxu0 %v11
  %821 = vmatmul.f32.gmra.mxu0 %v801
  %v822 = vpop.f32.mrf.mxu0
  %v823 = vadd.f32 0.0, %v822
  %824 = vmatmul.f32.gmra.mxu0 %v803
  %v825 = vpop.f32.mrf.mxu0
  %v826 = vadd.f32 0.0, %v825
  %827 = vdwg.mxu0
  %830 = vrot.lane.b32.xlu0 %v823, 64
  %v831 = vpop.permute.xlu0 %830
  %832 = vrot.lane.b32.xlu0 %v826, 64
  %v833 = vpop.permute.xlu0 %832
  %v836 = vadd.f32 %v795, %v831
  %v837 = vadd.f32 %v796, %v833
  %v838 = vsub.f32 0.0, %v836
  %v839 = vsub.f32 0.0, %v837
  %v840 = vmul.f32 %v838, 1.442695
  %v841 = vpow.pop %v840
  %v842 = vmul.f32 %v839, 1.442695
  %v843 = vpow.pop %v842
  %v844 = vadd.f32 %v841, 1.0
  %v845 = vadd.f32 %v843, 1.0
  %v846 = vrcp.pop %v844
  %v847 = vmul.f32 %v844, %v846
  %v848 = vsub.f32 1.0, %v847
  %v849 = vmul.f32 %v846, %v848
  %v850 = vadd.f32 %v846, %v849
  %vm851 = vweird.f32 %v844
  %vm852 = vweird.f32 %v846
  %vm853 = vmor %vm851, %vm852
  %v854 = vsel %vm853, %v846, %v850
  %v855 = vand.u32 2147483647, %v844
  %vm856 = vcmp.eq.f32.partialorder %v855, 8.507059e+37
  %v857 = vand.u32 %v844, 2147483648
  %v858 = vor.u32 1.1754944e-38, %v857
  %v859 = vsel %vm856, %v858, %v854
  %v860 = vmul.f32 1.0, %v859
  %v861 = vrcp.pop %v845
  %v862 = vmul.f32 %v845, %v861
  %v863 = vsub.f32 1.0, %v862
  %v864 = vmul.f32 %v861, %v863
  %v865 = vadd.f32 %v861, %v864
  %vm866 = vweird.f32 %v845
  %vm867 = vweird.f32 %v861
  %vm868 = vmor %vm866, %vm867
  %v869 = vsel %vm868, %v861, %v865
  %v870 = vand.u32 2147483647, %v845
  %vm871 = vcmp.eq.f32.partialorder %v870, 8.507059e+37
  %v872 = vand.u32 %v845, 2147483648
  %v873 = vor.u32 1.1754944e-38, %v872
  %v874 = vsel %vm871, %v873, %v869
  %v875 = vmul.f32 1.0, %v874
  %v876 = vtanh.pop %v836
  %v877 = vtanh.pop %v837
  %880 = vrot.lane.b32.xlu0 %v770, 32
  %v881 = vpop.permute.xlu0 %880
  %882 = vrot.lane.b32.xlu0 %v771, 32
  %v883 = vpop.permute.xlu0 %882
  %v886 = vmul.f32 %v860, %v881
  %v887 = vmul.f32 %v875, %v883
  %890 = vrot.lane.b32.xlu0 %v876, 104
  %v891 = vpop.permute.xlu0 %890
  %892 = vrot.lane.b32.xlu0 %v877, 104
  %v893 = vpop.permute.xlu0 %892
  %v896 = vmul.f32 %v860, %v891
  %v897 = vmul.f32 %v875, %v893
  %900 = vrot.lane.b32.xlu0 %v896, 8
  %v901 = vpop.permute.xlu0 %900
  %902 = vrot.lane.b32.xlu0 %v897, 8
  %v903 = vpop.permute.xlu0 %902
  %v906 = vadd.f32 %v886, %v901
  %v907 = vadd.f32 %v887, %v903
  %v908 = vtanh.pop %v906
  %v909 = vtanh.pop %v907
  %912 = vrot.lane.b32.xlu0 %v908, 8
  %v913 = vpop.permute.xlu0 %912
  %914 = vrot.lane.b32.xlu0 %v909, 8
  %v915 = vpop.permute.xlu0 %914
  %v918 = vmul.f32 %v860, %v913
  %v919 = vmul.f32 %v875, %v915
  %922 = vrot.lane.b32.xlu0 %v918, 96
  %v923 = vpop.permute.xlu0 %922
  %924 = vrot.lane.b32.xlu0 %v919, 96
  %v925 = vpop.permute.xlu0 %924
  %vm928 = vcmask 458112
  %929 = vst.msk [vmem:[%s2] sm:$0xff] %vm928, %v923
  %930 = vst.msk [vmem:[%s2 + $0x8] sm:$0xff] %vm928, %v925
  %v931 = vld [vmem:[%s0 + $0x8] sm:$0xff]
  %v932 = vld [vmem:[%s0 + $0x28] sm:$0xff]
  %933 = vrot.lane.b32.xlu0 %v918, 48
  %v934 = vpop.permute.xlu0 %933
  %935 = vrot.lane.b32.xlu0 %v919, 48
  %v936 = vpop.permute.xlu0 %935
  %v937 = vsel %vm14, %v934, 0
  %v939 = vsel %vm14, %v936, 0
  %941 = vmatpush.msra.mxu0 0.0
  %942 = vmatpush.msra.mxu0 0.0
  %943 = vmatpush.msra.mxu0 0.0
  %944 = vmatpush.msra.mxu0 0.0
  %945 = vmatpush.msra.mxu0 0.0
  %946 = vmatpush.msra.mxu0 0.0
  %947 = vmatpush.msra.mxu0 0.0
  %948 = vmatpush.msra.mxu0 0.0
  %949 = vmatpush.msra.mxu0 0.0
  %950 = vmatpush.msra.mxu0 0.0
  %951 = vmatpush.msra.mxu0 0.0
  %952 = vmatpush.msra.mxu0 0.0
  %953 = vmatpush.msra.mxu0 0.0
  %954 = vmatpush.msra.mxu0 0.0
  %955 = vmatpush.msra.mxu0 0.0
  %956 = vmatpush.msra.mxu0 %v11
  %957 = vmatmul.f32.gmra.mxu0 %v937
  %v958 = vpop.f32.mrf.mxu0
  %v959 = vadd.f32 0.0, %v958
  %960 = vmatmul.f32.gmra.mxu0 %v939
  %v961 = vpop.f32.mrf.mxu0
  %v962 = vadd.f32 0.0, %v961
  %963 = vdwg.mxu0
  %966 = vrot.lane.b32.xlu0 %v959, 96
  %v967 = vpop.permute.xlu0 %966
  %968 = vrot.lane.b32.xlu0 %v962, 96
  %v969 = vpop.permute.xlu0 %968
  %v972 = vadd.f32 %v931, %v967
  %v973 = vadd.f32 %v932, %v969
  %v974 = vsub.f32 0.0, %v972
  %v975 = vsub.f32 0.0, %v973
  %v976 = vmul.f32 %v974, 1.442695
  %v977 = vpow.pop %v976
  %v978 = vmul.f32 %v975, 1.442695
  %v979 = vpow.pop %v978
  %v980 = vadd.f32 %v977, 1.0
  %v981 = vadd.f32 %v979, 1.0
  %v982 = vrcp.pop %v980
  %v983 = vmul.f32 %v980, %v982
  %v984 = vsub.f32 1.0, %v983
  %v985 = vmul.f32 %v982, %v984
  %v986 = vadd.f32 %v982, %v985
  %vm987 = vweird.f32 %v980
  %vm988 = vweird.f32 %v982
  %vm989 = vmor %vm987, %vm988
  %v990 = vsel %vm989, %v982, %v986
  %v991 = vand.u32 2147483647, %v980
  %vm992 = vcmp.eq.f32.partialorder %v991, 8.507059e+37
  %v993 = vand.u32 %v980, 2147483648
  %v994 = vor.u32 1.1754944e-38, %v993
  %v995 = vsel %vm992, %v994, %v990
  %v996 = vmul.f32 1.0, %v995
  %v997 = vrcp.pop %v981
  %v998 = vmul.f32 %v981, %v997
  %v999 = vsub.f32 1.0, %v998
  %v1000 = vmul.f32 %v997, %v999
  %v1001 = vadd.f32 %v997, %v1000
  %vm1002 = vweird.f32 %v981
  %vm1003 = vweird.f32 %v997
  %vm1004 = vmor %vm1002, %vm1003
  %v1005 = vsel %vm1004, %v997, %v1001
  %v1006 = vand.u32 2147483647, %v981
  %vm1007 = vcmp.eq.f32.partialorder %v1006, 8.507059e+37
  %v1008 = vand.u32 %v981, 2147483648
  %v1009 = vor.u32 1.1754944e-38, %v1008
  %v1010 = vsel %vm1007, %v1009, %v1005
  %v1011 = vmul.f32 1.0, %v1010
  %v1012 = vtanh.pop %v972
  %v1013 = vtanh.pop %v973
  %1016 = vrot.lane.b32.xlu0 %v906, 32
  %v1017 = vpop.permute.xlu0 %1016
  %1018 = vrot.lane.b32.xlu0 %v907, 32
  %v1019 = vpop.permute.xlu0 %1018
  %v1022 = vmul.f32 %v996, %v1017
  %v1023 = vmul.f32 %v1011, %v1019
  %1026 = vrot.lane.b32.xlu0 %v1012, 104
  %v1027 = vpop.permute.xlu0 %1026
  %1028 = vrot.lane.b32.xlu0 %v1013, 104
  %v1029 = vpop.permute.xlu0 %1028
  %v1032 = vmul.f32 %v996, %v1027
  %v1033 = vmul.f32 %v1011, %v1029
  %1036 = vrot.lane.b32.xlu0 %v1032, 8
  %v1037 = vpop.permute.xlu0 %1036
  %1038 = vrot.lane.b32.xlu0 %v1033, 8
  %v1039 = vpop.permute.xlu0 %1038
  %v1042 = vadd.f32 %v1022, %v1037
  %v1043 = vadd.f32 %v1023, %v1039
  %v1044 = vtanh.pop %v1042
  %v1045 = vtanh.pop %v1043
  %1048 = vrot.lane.b32.xlu0 %v1044, 8
  %v1049 = vpop.permute.xlu0 %1048
  %1050 = vrot.lane.b32.xlu0 %v1045, 8
  %v1051 = vpop.permute.xlu0 %1050
  %v1054 = vmul.f32 %v996, %v1049
  %v1055 = vmul.f32 %v1011, %v1051
  %1058 = vrot.lane.b32.xlu0 %v1054, 72
  %v1059 = vpop.permute.xlu0 %1058
  %1060 = vrot.lane.b32.xlu0 %v1055, 72
  %v1061 = vpop.permute.xlu0 %1060
  %vm1064 = vcmask 523712
  %1065 = vst.msk [vmem:[%s2] sm:$0xff] %vm1064, %v1059
  %1066 = vst.msk [vmem:[%s2 + $0x8] sm:$0xff] %vm1064, %v1061
  %v1067 = vld [vmem:[%s0 + $0x10] sm:$0xff]
  %v1068 = vld [vmem:[%s0 + $0x30] sm:$0xff]
  %1069 = vrot.lane.b32.xlu0 %v1054, 16
  %v1070 = vpop.permute.xlu0 %1069
  %1071 = vrot.lane.b32.xlu0 %v1055, 16
  %v1072 = vpop.permute.xlu0 %1071
  %v1073 = vsel %vm14, %v1070, 0
  %v1075 = vsel %vm14, %v1072, 0
  %1077 = vmatpush.msra.mxu0 0.0
  %1078 = vmatpush.msra.mxu0 0.0
  %1079 = vmatpush.msra.mxu0 0.0
  %1080 = vmatpush.msra.mxu0 0.0
  %1081 = vmatpush.msra.mxu0 0.0
  %1082 = vmatpush.msra.mxu0 0.0
  %1083 = vmatpush.msra.mxu0 0.0
  %1084 = vmatpush.msra.mxu0 0.0
  %1085 = vmatpush.msra.mxu0 0.0
  %1086 = vmatpush.msra.mxu0 0.0
  %1087 = vmatpush.msra.mxu0 0.0
  %1088 = vmatpush.msra.mxu0 0.0
  %1089 = vmatpush.msra.mxu0 0.0
  %1090 = vmatpush.msra.mxu0 0.0
  %1091 = vmatpush.msra.mxu0 0.0
  %1092 = vmatpush.msra.mxu0 %v11
  %1093 = vmatmul.f32.gmra.mxu0 %v1073
  %v1094 = vpop.f32.mrf.mxu0
  %v1095 = vadd.f32 0.0, %v1094
  %1096 = vmatmul.f32.gmra.mxu0 %v1075
  %v1097 = vpop.f32.mrf.mxu0
  %v1098 = vadd.f32 0.0, %v1097
  %1099 = vdwg.mxu0
  %v1100 = vadd.f32 %v1067, %v1095
  %v1101 = vadd.f32 %v1068, %v1098
  %v1102 = vsub.f32 0.0, %v1100
  %v1103 = vsub.f32 0.0, %v1101
  %v1104 = vmul.f32 %v1102, 1.442695
  %v1105 = vpow.pop %v1104
  %v1106 = vmul.f32 %v1103, 1.442695
  %v1107 = vpow.pop %v1106
  %v1108 = vadd.f32 %v1105, 1.0
  %v1109 = vadd.f32 %v1107, 1.0
  %v1110 = vrcp.pop %v1108
  %v1111 = vmul.f32 %v1108, %v1110
  %v1112 = vsub.f32 1.0, %v1111
  %v1113 = vmul.f32 %v1110, %v1112
  %v1114 = vadd.f32 %v1110, %v1113
  %vm1115 = vweird.f32 %v1108
  %vm1116 = vweird.f32 %v1110
  %vm1117 = vmor %vm1115, %vm1116
  %v1118 = vsel %vm1117, %v1110, %v1114
  %v1119 = vand.u32 2147483647, %v1108
  %vm1120 = vcmp.eq.f32.partialorder %v1119, 8.507059e+37
  %v1121 = vand.u32 %v1108, 2147483648
  %v1122 = vor.u32 1.1754944e-38, %v1121
  %v1123 = vsel %vm1120, %v1122, %v1118
  %v1124 = vmul.f32 1.0, %v1123
  %v1125 = vrcp.pop %v1109
  %v1126 = vmul.f32 %v1109, %v1125
  %v1127 = vsub.f32 1.0, %v1126
  %v1128 = vmul.f32 %v1125, %v1127
  %v1129 = vadd.f32 %v1125, %v1128
  %vm1130 = vweird.f32 %v1109
  %vm1131 = vweird.f32 %v1125
  %vm1132 = vmor %vm1130, %vm1131
  %v1133 = vsel %vm1132, %v1125, %v1129
  %v1134 = vand.u32 2147483647, %v1109
  %vm1135 = vcmp.eq.f32.partialorder %v1134, 8.507059e+37
  %v1136 = vand.u32 %v1109, 2147483648
  %v1137 = vor.u32 1.1754944e-38, %v1136
  %v1138 = vsel %vm1135, %v1137, %v1133
  %v1139 = vmul.f32 1.0, %v1138
  %v1140 = vtanh.pop %v1100
  %v1141 = vtanh.pop %v1101
  %1144 = vrot.lane.b32.xlu0 %v1042, 32
  %v1145 = vpop.permute.xlu0 %1144
  %1146 = vrot.lane.b32.xlu0 %v1043, 32
  %v1147 = vpop.permute.xlu0 %1146
  %v1150 = vmul.f32 %v1124, %v1145
  %v1151 = vmul.f32 %v1139, %v1147
  %1154 = vrot.lane.b32.xlu0 %v1140, 104
  %v1155 = vpop.permute.xlu0 %1154
  %1156 = vrot.lane.b32.xlu0 %v1141, 104
  %v1157 = vpop.permute.xlu0 %1156
  %v1160 = vmul.f32 %v1124, %v1155
  %v1161 = vmul.f32 %v1139, %v1157
  %1164 = vrot.lane.b32.xlu0 %v1160, 8
  %v1165 = vpop.permute.xlu0 %1164
  %1166 = vrot.lane.b32.xlu0 %v1161, 8
  %v1167 = vpop.permute.xlu0 %1166
  %v1170 = vadd.f32 %v1150, %v1165
  %v1171 = vadd.f32 %v1151, %v1167
  %v1172 = vtanh.pop %v1170
  %v1173 = vtanh.pop %v1171
  %1176 = vrot.lane.b32.xlu0 %v1172, 8
  %v1177 = vpop.permute.xlu0 %1176
  %1178 = vrot.lane.b32.xlu0 %v1173, 8
  %v1179 = vpop.permute.xlu0 %1178
  %v1182 = vmul.f32 %v1124, %v1177
  %v1183 = vmul.f32 %v1139, %v1179
  %1186 = vrot.lane.b32.xlu0 %v1182, 48
  %v1187 = vpop.permute.xlu0 %1186
  %1188 = vrot.lane.b32.xlu0 %v1183, 48
  %v1189 = vpop.permute.xlu0 %1188
  %vm1192 = vcmask 589312
  %1193 = vst.msk [vmem:[%s2] sm:$0xff] %vm1192, %v1187
  %1194 = vst.msk [vmem:[%s2 + $0x8] sm:$0xff] %vm1192, %v1189
  %v1195 = vld [vmem:[%s0 + $0x10] sm:$0xff]
  %v1196 = vld [vmem:[%s0 + $0x30] sm:$0xff]
  %1197 = vrot.lane.b32.xlu0 %v1182, 112
  %v1198 = vpop.permute.xlu0 %1197
  %1199 = vrot.lane.b32.xlu0 %v1183, 112
  %v1200 = vpop.permute.xlu0 %1199
  %v1201 = vsel %vm14, %v1198, 0
  %v1203 = vsel %vm14, %v1200, 0
  %1205 = vmatpush.msra.mxu0 0.0
  %1206 = vmatpush.msra.mxu0 0.0
  %1207 = vmatpush.msra.mxu0 0.0
  %1208 = vmatpush.msra.mxu0 0.0
  %1209 = vmatpush.msra.mxu0 0.0
  %1210 = vmatpush.msra.mxu0 0.0
  %1211 = vmatpush.msra.mxu0 0.0
  %1212 = vmatpush.msra.mxu0 0.0
  %1213 = vmatpush.msra.mxu0 0.0
  %1214 = vmatpush.msra.mxu0 0.0
  %1215 = vmatpush.msra.mxu0 0.0
  %1216 = vmatpush.msra.mxu0 0.0
  %1217 = vmatpush.msra.mxu0 0.0
  %1218 = vmatpush.msra.mxu0 0.0
  %1219 = vmatpush.msra.mxu0 0.0
  %1220 = vmatpush.msra.mxu0 %v11
  %1221 = vmatmul.f32.gmra.mxu0 %v1201
  %v1222 = vpop.f32.mrf.mxu0
  %v1223 = vadd.f32 0.0, %v1222
  %1224 = vmatmul.f32.gmra.mxu0 %v1203
  %v1225 = vpop.f32.mrf.mxu0
  %v1226 = vadd.f32 0.0, %v1225
  %1227 = vdwg.mxu0
  %1230 = vrot.lane.b32.xlu0 %v1223, 32
  %v1231 = vpop.permute.xlu0 %1230
  %1232 = vrot.lane.b32.xlu0 %v1226, 32
  %v1233 = vpop.permute.xlu0 %1232
  %v1236 = vadd.f32 %v1195, %v1231
  %v1237 = vadd.f32 %v1196, %v1233
  %v1238 = vsub.f32 0.0, %v1236
  %v1239 = vsub.f32 0.0, %v1237
  %v1240 = vmul.f32 %v1238, 1.442695
  %v1241 = vpow.pop %v1240
  %v1242 = vmul.f32 %v1239, 1.442695
  %v1243 = vpow.pop %v1242
  %v1244 = vadd.f32 %v1241, 1.0
  %v1245 = vadd.f32 %v1243, 1.0
  %v1246 = vrcp.pop %v1244
  %v1247 = vmul.f32 %v1244, %v1246
  %v1248 = vsub.f32 1.0, %v1247
  %v1249 = vmul.f32 %v1246, %v1248
  %v1250 = vadd.f32 %v1246, %v1249
  %vm1251 = vweird.f32 %v1244
  %vm1252 = vweird.f32 %v1246
  %vm1253 = vmor %vm1251, %vm1252
  %v1254 = vsel %vm1253, %v1246, %v1250
  %v1255 = vand.u32 2147483647, %v1244
  %vm1256 = vcmp.eq.f32.partialorder %v1255, 8.507059e+37
  %v1257 = vand.u32 %v1244, 2147483648
  %v1258 = vor.u32 1.1754944e-38, %v1257
  %v1259 = vsel %vm1256, %v1258, %v1254
  %v1260 = vmul.f32 1.0, %v1259
  %v1261 = vrcp.pop %v1245
  %v1262 = vmul.f32 %v1245, %v1261
  %v1263 = vsub.f32 1.0, %v1262
  %v1264 = vmul.f32 %v1261, %v1263
  %v1265 = vadd.f32 %v1261, %v1264
  %vm1266 = vweird.f32 %v1245
  %vm1267 = vweird.f32 %v1261
  %vm1268 = vmor %vm1266, %vm1267
  %v1269 = vsel %vm1268, %v1261, %v1265
  %v1270 = vand.u32 2147483647, %v1245
  %vm1271 = vcmp.eq.f32.partialorder %v1270, 8.507059e+37
  %v1272 = vand.u32 %v1245, 2147483648
  %v1273 = vor.u32 1.1754944e-38, %v1272
  %v1274 = vsel %vm1271, %v1273, %v1269
  %v1275 = vmul.f32 1.0, %v1274
  %v1276 = vtanh.pop %v1236
  %v1277 = vtanh.pop %v1237
  %1280 = vrot.lane.b32.xlu0 %v1170, 32
  %v1281 = vpop.permute.xlu0 %1280
  %1282 = vrot.lane.b32.xlu0 %v1171, 32
  %v1283 = vpop.permute.xlu0 %1282
  %v1286 = vmul.f32 %v1260, %v1281
  %v1287 = vmul.f32 %v1275, %v1283
  %1290 = vrot.lane.b32.xlu0 %v1276, 104
  %v1291 = vpop.permute.xlu0 %1290
  %1292 = vrot.lane.b32.xlu0 %v1277, 104
  %v1293 = vpop.permute.xlu0 %1292
  %v1296 = vmul.f32 %v1260, %v1291
  %v1297 = vmul.f32 %v1275, %v1293
  %1300 = vrot.lane.b32.xlu0 %v1296, 8
  %v1301 = vpop.permute.xlu0 %1300
  %1302 = vrot.lane.b32.xlu0 %v1297, 8
  %v1303 = vpop.permute.xlu0 %1302
  %v1306 = vadd.f32 %v1286, %v1301
  %v1307 = vadd.f32 %v1287, %v1303
  %v1308 = vtanh.pop %v1306
  %v1309 = vtanh.pop %v1307
  %1312 = vrot.lane.b32.xlu0 %v1308, 8
  %v1313 = vpop.permute.xlu0 %1312
  %1314 = vrot.lane.b32.xlu0 %v1309, 8
  %v1315 = vpop.permute.xlu0 %1314
  %v1318 = vmul.f32 %v1260, %v1313
  %v1319 = vmul.f32 %v1275, %v1315
  %1322 = vrot.lane.b32.xlu0 %v1318, 24
  %v1323 = vpop.permute.xlu0 %1322
  %1324 = vrot.lane.b32.xlu0 %v1319, 24
  %v1325 = vpop.permute.xlu0 %1324
  %vm1328 = vcmask 654912
  %1329 = vst.msk [vmem:[%s2] sm:$0xff] %vm1328, %v1323
  %1330 = vst.msk [vmem:[%s2 + $0x8] sm:$0xff] %vm1328, %v1325
  %v1331 = vld [vmem:[%s0 + $0x10] sm:$0xff]
  %v1332 = vld [vmem:[%s0 + $0x30] sm:$0xff]
  %1333 = vrot.lane.b32.xlu0 %v1318, 80
  %v1334 = vpop.permute.xlu0 %1333
  %1335 = vrot.lane.b32.xlu0 %v1319, 80
  %v1336 = vpop.permute.xlu0 %1335
  %v1337 = vsel %vm14, %v1334, 0
  %v1339 = vsel %vm14, %v1336, 0
  %1341 = vmatpush.msra.mxu0 0.0
  %1342 = vmatpush.msra.mxu0 0.0
  %1343 = vmatpush.msra.mxu0 0.0
  %1344 = vmatpush.msra.mxu0 0.0
  %1345 = vmatpush.msra.mxu0 0.0
  %1346 = vmatpush.msra.mxu0 0.0
  %1347 = vmatpush.msra.mxu0 0.0
  %1348 = vmatpush.msra.mxu0 0.0
  %1349 = vmatpush.msra.mxu0 0.0
  %1350 = vmatpush.msra.mxu0 0.0
  %1351 = vmatpush.msra.mxu0 0.0
  %1352 = vmatpush.msra.mxu0 0.0
  %1353 = vmatpush.msra.mxu0 0.0
  %1354 = vmatpush.msra.mxu0 0.0
  %1355 = vmatpush.msra.mxu0 0.0
  %1356 = vmatpush.msra.mxu0 %v11
  %1357 = vmatmul.f32.gmra.mxu0 %v1337
  %v1358 = vpop.f32.mrf.mxu0
  %v1359 = vadd.f32 0.0, %v1358
  %1360 = vmatmul.f32.gmra.mxu0 %v1339
  %v1361 = vpop.f32.mrf.mxu0
  %v1362 = vadd.f32 0.0, %v1361
  %1363 = vdwg.mxu0
  %1366 = vrot.lane.b32.xlu0 %v1359, 64
  %v1367 = vpop.permute.xlu0 %1366
  %1368 = vrot.lane.b32.xlu0 %v1362, 64
  %v1369 = vpop.permute.xlu0 %1368
  %v1372 = vadd.f32 %v1331, %v1367
  %v1373 = vadd.f32 %v1332, %v1369
  %v1374 = vsub.f32 0.0, %v1372
  %v1375 = vsub.f32 0.0, %v1373
  %v1376 = vmul.f32 %v1374, 1.442695
  %v1377 = vpow.pop %v1376
  %v1378 = vmul.f32 %v1375, 1.442695
  %v1379 = vpow.pop %v1378
  %v1380 = vadd.f32 %v1377, 1.0
  %v1381 = vadd.f32 %v1379, 1.0
  %v1382 = vrcp.pop %v1380
  %v1383 = vmul.f32 %v1380, %v1382
  %v1384 = vsub.f32 1.0, %v1383
  %v1385 = vmul.f32 %v1382, %v1384
  %v1386 = vadd.f32 %v1382, %v1385
  %vm1387 = vweird.f32 %v1380
  %vm1388 = vweird.f32 %v1382
  %vm1389 = vmor %vm1387, %vm1388
  %v1390 = vsel %vm1389, %v1382, %v1386
  %v1391 = vand.u32 2147483647, %v1380
  %vm1392 = vcmp.eq.f32.partialorder %v1391, 8.507059e+37
  %v1393 = vand.u32 %v1380, 2147483648
  %v1394 = vor.u32 1.1754944e-38, %v1393
  %v1395 = vsel %vm1392, %v1394, %v1390
  %v1396 = vmul.f32 1.0, %v1395
  %v1397 = vrcp.pop %v1381
  %v1398 = vmul.f32 %v1381, %v1397
  %v1399 = vsub.f32 1.0, %v1398
  %v1400 = vmul.f32 %v1397, %v1399
  %v1401 = vadd.f32 %v1397, %v1400
  %vm1402 = vweird.f32 %v1381
  %vm1403 = vweird.f32 %v1397
  %vm1404 = vmor %vm1402, %vm1403
  %v1405 = vsel %vm1404, %v1397, %v1401
  %v1406 = vand.u32 2147483647, %v1381
  %vm1407 = vcmp.eq.f32.partialorder %v1406, 8.507059e+37
  %v1408 = vand.u32 %v1381, 2147483648
  %v1409 = vor.u32 1.1754944e-38, %v1408
  %v1410 = vsel %vm1407, %v1409, %v1405
  %v1411 = vmul.f32 1.0, %v1410
  %v1412 = vtanh.pop %v1372
  %v1413 = vtanh.pop %v1373
  %1416 = vrot.lane.b32.xlu0 %v1306, 32
  %v1417 = vpop.permute.xlu0 %1416
  %1418 = vrot.lane.b32.xlu0 %v1307, 32
  %v1419 = vpop.permute.xlu0 %1418
  %v1422 = vmul.f32 %v1396, %v1417
  %v1423 = vmul.f32 %v1411, %v1419
  %1426 = vrot.lane.b32.xlu0 %v1412, 104
  %v1427 = vpop.permute.xlu0 %1426
  %1428 = vrot.lane.b32.xlu0 %v1413, 104
  %v1429 = vpop.permute.xlu0 %1428
  %v1432 = vmul.f32 %v1396, %v1427
  %v1433 = vmul.f32 %v1411, %v1429
  %1436 = vrot.lane.b32.xlu0 %v1432, 8
  %v1437 = vpop.permute.xlu0 %1436
  %1438 = vrot.lane.b32.xlu0 %v1433, 8
  %v1439 = vpop.permute.xlu0 %1438
  %v1442 = vadd.f32 %v1422, %v1437
  %v1443 = vadd.f32 %v1423, %v1439
  %v1444 = vtanh.pop %v1442
  %v1445 = vtanh.pop %v1443
  %1448 = vrot.lane.b32.xlu0 %v1444, 8
  %v1449 = vpop.permute.xlu0 %1448
  %1450 = vrot.lane.b32.xlu0 %v1445, 8
  %v1451 = vpop.permute.xlu0 %1450
  %v1454 = vmul.f32 %v1396, %v1449
  %v1455 = vmul.f32 %v1411, %v1451
  %vm1456 = vcmask 720512
  %1457 = vst.msk [vmem:[%s2] sm:$0xff] %vm1456, %v1454
  %1458 = vst.msk [vmem:[%s2 + $0x8] sm:$0xff] %vm1456, %v1455
  %v1459 = vld [vmem:[%s0 + $0x10] sm:$0xff]
  %v1460 = vld [vmem:[%s0 + $0x30] sm:$0xff]
  %1463 = vrot.lane.b32.xlu0 %v1454, 48
  %v1464 = vpop.permute.xlu0 %1463
  %1465 = vrot.lane.b32.xlu0 %v1455, 48
  %v1466 = vpop.permute.xlu0 %1465
  %v1467 = vsel %vm14, %v1464, 0
  %v1469 = vsel %vm14, %v1466, 0
  %1471 = vmatpush.msra.mxu0 0.0
  %1472 = vmatpush.msra.mxu0 0.0
  %1473 = vmatpush.msra.mxu0 0.0
  %1474 = vmatpush.msra.mxu0 0.0
  %1475 = vmatpush.msra.mxu0 0.0
  %1476 = vmatpush.msra.mxu0 0.0
  %1477 = vmatpush.msra.mxu0 0.0
  %1478 = vmatpush.msra.mxu0 0.0
  %1479 = vmatpush.msra.mxu0 0.0
  %1480 = vmatpush.msra.mxu0 0.0
  %1481 = vmatpush.msra.mxu0 0.0
  %1482 = vmatpush.msra.mxu0 0.0
  %1483 = vmatpush.msra.mxu0 0.0
  %1484 = vmatpush.msra.mxu0 0.0
  %1485 = vmatpush.msra.mxu0 0.0
  %1486 = vmatpush.msra.mxu0 %v11
  %1487 = vmatmul.f32.gmra.mxu0 %v1467
  %v1488 = vpop.f32.mrf.mxu0
  %v1489 = vadd.f32 0.0, %v1488
  %1490 = vmatmul.f32.gmra.mxu0 %v1469
  %v1491 = vpop.f32.mrf.mxu0
  %v1492 = vadd.f32 0.0, %v1491
  %1493 = vdwg.mxu0
  %1496 = vrot.lane.b32.xlu0 %v1489, 96
  %v1497 = vpop.permute.xlu0 %1496
  %1498 = vrot.lane.b32.xlu0 %v1492, 96
  %v1499 = vpop.permute.xlu0 %1498
  %v1502 = vadd.f32 %v1459, %v1497
  %v1503 = vadd.f32 %v1460, %v1499
  %v1504 = vsub.f32 0.0, %v1502
  %v1505 = vsub.f32 0.0, %v1503
  %v1506 = vmul.f32 %v1504, 1.442695
  %v1507 = vpow.pop %v1506
  %v1508 = vmul.f32 %v1505, 1.442695
  %v1509 = vpow.pop %v1508
  %v1510 = vadd.f32 %v1507, 1.0
  %v1511 = vadd.f32 %v1509, 1.0
  %v1512 = vrcp.pop %v1510
  %v1513 = vmul.f32 %v1510, %v1512
  %v1514 = vsub.f32 1.0, %v1513
  %v1515 = vmul.f32 %v1512, %v1514
  %v1516 = vadd.f32 %v1512, %v1515
  %vm1517 = vweird.f32 %v1510
  %vm1518 = vweird.f32 %v1512
  %vm1519 = vmor %vm1517, %vm1518
  %v1520 = vsel %vm1519, %v1512, %v1516
  %v1521 = vand.u32 2147483647, %v1510
  %vm1522 = vcmp.eq.f32.partialorder %v1521, 8.507059e+37
  %v1523 = vand.u32 %v1510, 2147483648
  %v1524 = vor.u32 1.1754944e-38, %v1523
  %v1525 = vsel %vm1522, %v1524, %v1520
  %v1526 = vmul.f32 1.0, %v1525
  %v1527 = vrcp.pop %v1511
  %v1528 = vmul.f32 %v1511, %v1527
  %v1529 = vsub.f32 1.0, %v1528
  %v1530 = vmul.f32 %v1527, %v1529
  %v1531 = vadd.f32 %v1527, %v1530
  %vm1532 = vweird.f32 %v1511
  %vm1533 = vweird.f32 %v1527
  %vm1534 = vmor %vm1532, %vm1533
  %v1535 = vsel %vm1534, %v1527, %v1531
  %v1536 = vand.u32 2147483647, %v1511
  %vm1537 = vcmp.eq.f32.partialorder %v1536, 8.507059e+37
  %v1538 = vand.u32 %v1511, 2147483648
  %v1539 = vor.u32 1.1754944e-38, %v1538
  %v1540 = vsel %vm1537, %v1539, %v1535
  %v1541 = vmul.f32 1.0, %v1540
  %v1542 = vtanh.pop %v1502
  %v1543 = vtanh.pop %v1503
  %1546 = vrot.lane.b32.xlu0 %v1442, 32
  %v1547 = vpop.permute.xlu0 %1546
  %1548 = vrot.lane.b32.xlu0 %v1443, 32
  %v1549 = vpop.permute.xlu0 %1548
  %v1552 = vmul.f32 %v1526, %v1547
  %v1553 = vmul.f32 %v1541, %v1549
  %1556 = vrot.lane.b32.xlu0 %v1542, 104
  %v1557 = vpop.permute.xlu0 %1556
  %1558 = vrot.lane.b32.xlu0 %v1543, 104
  %v1559 = vpop.permute.xlu0 %1558
  %v1562 = vmul.f32 %v1526, %v1557
  %v1563 = vmul.f32 %v1541, %v1559
  %1566 = vrot.lane.b32.xlu0 %v1562, 8
  %v1567 = vpop.permute.xlu0 %1566
  %1568 = vrot.lane.b32.xlu0 %v1563, 8
  %v1569 = vpop.permute.xlu0 %1568
  %v1572 = vadd.f32 %v1552, %v1567
  %v1573 = vadd.f32 %v1553, %v1569
  %v1574 = vtanh.pop %v1572
  %v1575 = vtanh.pop %v1573
  %1578 = vrot.lane.b32.xlu0 %v1574, 8
  %v1579 = vpop.permute.xlu0 %1578
  %1580 = vrot.lane.b32.xlu0 %v1575, 8
  %v1581 = vpop.permute.xlu0 %1580
  %v1584 = vmul.f32 %v1526, %v1579
  %v1585 = vmul.f32 %v1541, %v1581
  %1588 = vrot.lane.b32.xlu0 %v1584, 104
  %v1589 = vpop.permute.xlu0 %1588
  %1590 = vrot.lane.b32.xlu0 %v1585, 104
  %v1591 = vpop.permute.xlu0 %1590
  %vm1594 = vcmask 786112
  %1595 = vst.msk [vmem:[%s2] sm:$0xff] %vm1594, %v1589
  %1596 = vst.msk [vmem:[%s2 + $0x8] sm:$0xff] %vm1594, %v1591
  %v1597 = vld [vmem:[%s0 + $0x18] sm:$0xff]
  %v1598 = vld [vmem:[%s0 + $0x38] sm:$0xff]
  %1599 = vrot.lane.b32.xlu0 %v1584, 16
  %v1600 = vpop.permute.xlu0 %1599
  %1601 = vrot.lane.b32.xlu0 %v1585, 16
  %v1602 = vpop.permute.xlu0 %1601
  %v1603 = vsel %vm14, %v1600, 0
  %v1605 = vsel %vm14, %v1602, 0
  %1607 = vmatpush.msra.mxu0 0.0
  %1608 = vmatpush.msra.mxu0 0.0
  %1609 = vmatpush.msra.mxu0 0.0
  %1610 = vmatpush.msra.mxu0 0.0
  %1611 = vmatpush.msra.mxu0 0.0
  %1612 = vmatpush.msra.mxu0 0.0
  %1613 = vmatpush.msra.mxu0 0.0
  %1614 = vmatpush.msra.mxu0 0.0
  %1615 = vmatpush.msra.mxu0 0.0
  %1616 = vmatpush.msra.mxu0 0.0
  %1617 = vmatpush.msra.mxu0 0.0
  %1618 = vmatpush.msra.mxu0 0.0
  %1619 = vmatpush.msra.mxu0 0.0
  %1620 = vmatpush.msra.mxu0 0.0
  %1621 = vmatpush.msra.mxu0 0.0
  %1622 = vmatpush.msra.mxu0 %v11
  %1623 = vmatmul.f32.gmra.mxu0 %v1603
  %v1624 = vpop.f32.mrf.mxu0
  %v1625 = vadd.f32 0.0, %v1624
  %1626 = vmatmul.f32.gmra.mxu0 %v1605
  %v1627 = vpop.f32.mrf.mxu0
  %v1628 = vadd.f32 0.0, %v1627
  %1629 = vdwg.mxu0
  %v1630 = vadd.f32 %v1597, %v1625
  %v1631 = vadd.f32 %v1598, %v1628
  %v1632 = vsub.f32 0.0, %v1630
  %v1633 = vsub.f32 0.0, %v1631
  %v1634 = vmul.f32 %v1632, 1.442695
  %v1635 = vpow.pop %v1634
  %v1636 = vmul.f32 %v1633, 1.442695
  %v1637 = vpow.pop %v1636
  %v1638 = vadd.f32 %v1635, 1.0
  %v1639 = vadd.f32 %v1637, 1.0
  %v1640 = vrcp.pop %v1638
  %v1641 = vmul.f32 %v1638, %v1640
  %v1642 = vsub.f32 1.0, %v1641
  %v1643 = vmul.f32 %v1640, %v1642
  %v1644 = vadd.f32 %v1640, %v1643
  %vm1645 = vweird.f32 %v1638
  %vm1646 = vweird.f32 %v1640
  %vm1647 = vmor %vm1645, %vm1646
  %v1648 = vsel %vm1647, %v1640, %v1644
  %v1649 = vand.u32 2147483647, %v1638
  %vm1650 = vcmp.eq.f32.partialorder %v1649, 8.507059e+37
  %v1651 = vand.u32 %v1638, 2147483648
  %v1652 = vor.u32 1.1754944e-38, %v1651
  %v1653 = vsel %vm1650, %v1652, %v1648
  %v1654 = vmul.f32 1.0, %v1653
  %v1655 = vrcp.pop %v1639
  %v1656 = vmul.f32 %v1639, %v1655
  %v1657 = vsub.f32 1.0, %v1656
  %v1658 = vmul.f32 %v1655, %v1657
  %v1659 = vadd.f32 %v1655, %v1658
  %vm1660 = vweird.f32 %v1639
  %vm1661 = vweird.f32 %v1655
  %vm1662 = vmor %vm1660, %vm1661
  %v1663 = vsel %vm1662, %v1655, %v1659
  %v1664 = vand.u32 2147483647, %v1639
  %vm1665 = vcmp.eq.f32.partialorder %v1664, 8.507059e+37
  %v1666 = vand.u32 %v1639, 2147483648
  %v1667 = vor.u32 1.1754944e-38, %v1666
  %v1668 = vsel %vm1665, %v1667, %v1663
  %v1669 = vmul.f32 1.0, %v1668
  %v1670 = vtanh.pop %v1630
  %v1671 = vtanh.pop %v1631
  %1674 = vrot.lane.b32.xlu0 %v1572, 32
  %v1675 = vpop.permute.xlu0 %1674
  %1676 = vrot.lane.b32.xlu0 %v1573, 32
  %v1677 = vpop.permute.xlu0 %1676
  %v1680 = vmul.f32 %v1654, %v1675
  %v1681 = vmul.f32 %v1669, %v1677
  %1684 = vrot.lane.b32.xlu0 %v1670, 104
  %v1685 = vpop.permute.xlu0 %1684
  %1686 = vrot.lane.b32.xlu0 %v1671, 104
  %v1687 = vpop.permute.xlu0 %1686
  %v1690 = vmul.f32 %v1654, %v1685
  %v1691 = vmul.f32 %v1669, %v1687
  %1694 = vrot.lane.b32.xlu0 %v1690, 8
  %v1695 = vpop.permute.xlu0 %1694
  %1696 = vrot.lane.b32.xlu0 %v1691, 8
  %v1697 = vpop.permute.xlu0 %1696
  %v1700 = vadd.f32 %v1680, %v1695
  %v1701 = vadd.f32 %v1681, %v1697
  %v1702 = vtanh.pop %v1700
  %v1703 = vtanh.pop %v1701
  %1706 = vrot.lane.b32.xlu0 %v1702, 8
  %v1707 = vpop.permute.xlu0 %1706
  %1708 = vrot.lane.b32.xlu0 %v1703, 8
  %v1709 = vpop.permute.xlu0 %1708
  %v1712 = vmul.f32 %v1654, %v1707
  %v1713 = vmul.f32 %v1669, %v1709
  %1716 = vrot.lane.b32.xlu0 %v1712, 80
  %v1717 = vpop.permute.xlu0 %1716
  %1718 = vrot.lane.b32.xlu0 %v1713, 80
  %v1719 = vpop.permute.xlu0 %1718
  %vm1722 = vcmask 851712
  %1723 = vst.msk [vmem:[%s2] sm:$0xff] %vm1722, %v1717
  %1724 = vst.msk [vmem:[%s2 + $0x8] sm:$0xff] %vm1722, %v1719
  %v1725 = vld [vmem:[%s0 + $0x18] sm:$0xff]
  %v1726 = vld [vmem:[%s0 + $0x38] sm:$0xff]
  %1727 = vrot.lane.b32.xlu0 %v1712, 112
  %v1728 = vpop.permute.xlu0 %1727
  %1729 = vrot.lane.b32.xlu0 %v1713, 112
  %v1730 = vpop.permute.xlu0 %1729
  %v1731 = vsel %vm14, %v1728, 0
  %v1733 = vsel %vm14, %v1730, 0
  %1735 = vmatpush.msra.mxu0 0.0
  %1736 = vmatpush.msra.mxu0 0.0
  %1737 = vmatpush.msra.mxu0 0.0
  %1738 = vmatpush.msra.mxu0 0.0
  %1739 = vmatpush.msra.mxu0 0.0
  %1740 = vmatpush.msra.mxu0 0.0
  %1741 = vmatpush.msra.mxu0 0.0
  %1742 = vmatpush.msra.mxu0 0.0
  %1743 = vmatpush.msra.mxu0 0.0
  %1744 = vmatpush.msra.mxu0 0.0
  %1745 = vmatpush.msra.mxu0 0.0
  %1746 = vmatpush.msra.mxu0 0.0
  %1747 = vmatpush.msra.mxu0 0.0
  %1748 = vmatpush.msra.mxu0 0.0
  %1749 = vmatpush.msra.mxu0 0.0
  %1750 = vmatpush.msra.mxu0 %v11
  %1751 = vmatmul.f32.gmra.mxu0 %v1731
  %v1752 = vpop.f32.mrf.mxu0
  %v1753 = vadd.f32 0.0, %v1752
  %1754 = vmatmul.f32.gmra.mxu0 %v1733
  %v1755 = vpop.f32.mrf.mxu0
  %v1756 = vadd.f32 0.0, %v1755
  %1757 = vdwg.mxu0
  %1760 = vrot.lane.b32.xlu0 %v1753, 32
  %v1761 = vpop.permute.xlu0 %1760
  %1762 = vrot.lane.b32.xlu0 %v1756, 32
  %v1763 = vpop.permute.xlu0 %1762
  %v1766 = vadd.f32 %v1725, %v1761
  %v1767 = vadd.f32 %v1726, %v1763
  %v1768 = vsub.f32 0.0, %v1766
  %v1769 = vsub.f32 0.0, %v1767
  %v1770 = vmul.f32 %v1768, 1.442695
  %v1771 = vpow.pop %v1770
  %v1772 = vmul.f32 %v1769, 1.442695
  %v1773 = vpow.pop %v1772
  %v1774 = vadd.f32 %v1771, 1.0
  %v1775 = vadd.f32 %v1773, 1.0
  %v1776 = vrcp.pop %v1774
  %v1777 = vmul.f32 %v1774, %v1776
  %v1778 = vsub.f32 1.0, %v1777
  %v1779 = vmul.f32 %v1776, %v1778
  %v1780 = vadd.f32 %v1776, %v1779
  %vm1781 = vweird.f32 %v1774
  %vm1782 = vweird.f32 %v1776
  %vm1783 = vmor %vm1781, %vm1782
  %v1784 = vsel %vm1783, %v1776, %v1780
  %v1785 = vand.u32 2147483647, %v1774
  %vm1786 = vcmp.eq.f32.partialorder %v1785, 8.507059e+37
  %v1787 = vand.u32 %v1774, 2147483648
  %v1788 = vor.u32 1.1754944e-38, %v1787
  %v1789 = vsel %vm1786, %v1788, %v1784
  %v1790 = vmul.f32 1.0, %v1789
  %v1791 = vrcp.pop %v1775
  %v1792 = vmul.f32 %v1775, %v1791
  %v1793 = vsub.f32 1.0, %v1792
  %v1794 = vmul.f32 %v1791, %v1793
  %v1795 = vadd.f32 %v1791, %v1794
  %vm1796 = vweird.f32 %v1775
  %vm1797 = vweird.f32 %v1791
  %vm1798 = vmor %vm1796, %vm1797
  %v1799 = vsel %vm1798, %v1791, %v1795
  %v1800 = vand.u32 2147483647, %v1775
  %vm1801 = vcmp.eq.f32.partialorder %v1800, 8.507059e+37
  %v1802 = vand.u32 %v1775, 2147483648
  %v1803 = vor.u32 1.1754944e-38, %v1802
  %v1804 = vsel %vm1801, %v1803, %v1799
  %v1805 = vmul.f32 1.0, %v1804
  %v1806 = vtanh.pop %v1766
  %v1807 = vtanh.pop %v1767
  %1810 = vrot.lane.b32.xlu0 %v1700, 32
  %v1811 = vpop.permute.xlu0 %1810
  %1812 = vrot.lane.b32.xlu0 %v1701, 32
  %v1813 = vpop.permute.xlu0 %1812
  %v1816 = vmul.f32 %v1790, %v1811
  %v1817 = vmul.f32 %v1805, %v1813
  %1820 = vrot.lane.b32.xlu0 %v1806, 104
  %v1821 = vpop.permute.xlu0 %1820
  %1822 = vrot.lane.b32.xlu0 %v1807, 104
  %v1823 = vpop.permute.xlu0 %1822
  %v1826 = vmul.f32 %v1790, %v1821
  %v1827 = vmul.f32 %v1805, %v1823
  %1830 = vrot.lane.b32.xlu0 %v1826, 8
  %v1831 = vpop.permute.xlu0 %1830
  %1832 = vrot.lane.b32.xlu0 %v1827, 8
  %v1833 = vpop.permute.xlu0 %1832
  %v1836 = vadd.f32 %v1816, %v1831
  %v1837 = vadd.f32 %v1817, %v1833
  %v1838 = vtanh.pop %v1836
  %v1839 = vtanh.pop %v1837
  %1842 = vrot.lane.b32.xlu0 %v1838, 8
  %v1843 = vpop.permute.xlu0 %1842
  %1844 = vrot.lane.b32.xlu0 %v1839, 8
  %v1845 = vpop.permute.xlu0 %1844
  %v1848 = vmul.f32 %v1790, %v1843
  %v1849 = vmul.f32 %v1805, %v1845
  %1852 = vrot.lane.b32.xlu0 %v1848, 56
  %v1853 = vpop.permute.xlu0 %1852
  %1854 = vrot.lane.b32.xlu0 %v1849, 56
  %v1855 = vpop.permute.xlu0 %1854
  %vm1858 = vcmask 917312
  %1859 = vst.msk [vmem:[%s2] sm:$0xff] %vm1858, %v1853
  %1860 = vst.msk [vmem:[%s2 + $0x8] sm:$0xff] %vm1858, %v1855
  %v1861 = vld [vmem:[%s0 + $0x18] sm:$0xff]
  %v1862 = vld [vmem:[%s0 + $0x38] sm:$0xff]
  %1863 = vrot.lane.b32.xlu0 %v1848, 80
  %v1864 = vpop.permute.xlu0 %1863
  %1865 = vrot.lane.b32.xlu0 %v1849, 80
  %v1866 = vpop.permute.xlu0 %1865
  %v1867 = vsel %vm14, %v1864, 0
  %v1869 = vsel %vm14, %v1866, 0
  %1871 = vmatpush.msra.mxu0 0.0
  %1872 = vmatpush.msra.mxu0 0.0
  %1873 = vmatpush.msra.mxu0 0.0
  %1874 = vmatpush.msra.mxu0 0.0
  %1875 = vmatpush.msra.mxu0 0.0
  %1876 = vmatpush.msra.mxu0 0.0
  %1877 = vmatpush.msra.mxu0 0.0
  %1878 = vmatpush.msra.mxu0 0.0
  %1879 = vmatpush.msra.mxu0 0.0
  %1880 = vmatpush.msra.mxu0 0.0
  %1881 = vmatpush.msra.mxu0 0.0
  %1882 = vmatpush.msra.mxu0 0.0
  %1883 = vmatpush.msra.mxu0 0.0
  %1884 = vmatpush.msra.mxu0 0.0
  %1885 = vmatpush.msra.mxu0 0.0
  %1886 = vmatpush.msra.mxu0 %v11
  %1887 = vmatmul.f32.gmra.mxu0 %v1867
  %v1888 = vpop.f32.mrf.mxu0
  %v1889 = vadd.f32 0.0, %v1888
  %1890 = vmatmul.f32.gmra.mxu0 %v1869
  %v1891 = vpop.f32.mrf.mxu0
  %v1892 = vadd.f32 0.0, %v1891
  %1893 = vdwg.mxu0
  %1896 = vrot.lane.b32.xlu0 %v1889, 64
  %v1897 = vpop.permute.xlu0 %1896
  %1898 = vrot.lane.b32.xlu0 %v1892, 64
  %v1899 = vpop.permute.xlu0 %1898
  %v1902 = vadd.f32 %v1861, %v1897
  %v1903 = vadd.f32 %v1862, %v1899
  %v1904 = vsub.f32 0.0, %v1902
  %v1905 = vsub.f32 0.0, %v1903
  %v1906 = vmul.f32 %v1904, 1.442695
  %v1907 = vpow.pop %v1906
  %v1908 = vmul.f32 %v1905, 1.442695
  %v1909 = vpow.pop %v1908
  %v1910 = vadd.f32 %v1907, 1.0
  %v1911 = vadd.f32 %v1909, 1.0
  %v1912 = vrcp.pop %v1910
  %v1913 = vmul.f32 %v1910, %v1912
  %v1914 = vsub.f32 1.0, %v1913
  %v1915 = vmul.f32 %v1912, %v1914
  %v1916 = vadd.f32 %v1912, %v1915
  %vm1917 = vweird.f32 %v1910
  %vm1918 = vweird.f32 %v1912
  %vm1919 = vmor %vm1917, %vm1918
  %v1920 = vsel %vm1919, %v1912, %v1916
  %v1921 = vand.u32 2147483647, %v1910
  %vm1922 = vcmp.eq.f32.partialorder %v1921, 8.507059e+37
  %v1923 = vand.u32 %v1910, 2147483648
  %v1924 = vor.u32 1.1754944e-38, %v1923
  %v1925 = vsel %vm1922, %v1924, %v1920
  %v1926 = vmul.f32 1.0, %v1925
  %v1927 = vrcp.pop %v1911
  %v1928 = vmul.f32 %v1911, %v1927
  %v1929 = vsub.f32 1.0, %v1928
  %v1930 = vmul.f32 %v1927, %v1929
  %v1931 = vadd.f32 %v1927, %v1930
  %vm1932 = vweird.f32 %v1911
  %vm1933 = vweird.f32 %v1927
  %vm1934 = vmor %vm1932, %vm1933
  %v1935 = vsel %vm1934, %v1927, %v1931
  %v1936 = vand.u32 2147483647, %v1911
  %vm1937 = vcmp.eq.f32.partialorder %v1936, 8.507059e+37
  %v1938 = vand.u32 %v1911, 2147483648
  %v1939 = vor.u32 1.1754944e-38, %v1938
  %v1940 = vsel %vm1937, %v1939, %v1935
  %v1941 = vmul.f32 1.0, %v1940
  %v1942 = vtanh.pop %v1902
  %v1943 = vtanh.pop %v1903
  %1946 = vrot.lane.b32.xlu0 %v1836, 32
  %v1947 = vpop.permute.xlu0 %1946
  %1948 = vrot.lane.b32.xlu0 %v1837, 32
  %v1949 = vpop.permute.xlu0 %1948
  %v1952 = vmul.f32 %v1926, %v1947
  %v1953 = vmul.f32 %v1941, %v1949
  %1956 = vrot.lane.b32.xlu0 %v1942, 104
  %v1957 = vpop.permute.xlu0 %1956
  %1958 = vrot.lane.b32.xlu0 %v1943, 104
  %v1959 = vpop.permute.xlu0 %1958
  %v1962 = vmul.f32 %v1926, %v1957
  %v1963 = vmul.f32 %v1941, %v1959
  %1966 = vrot.lane.b32.xlu0 %v1962, 8
  %v1967 = vpop.permute.xlu0 %1966
  %1968 = vrot.lane.b32.xlu0 %v1963, 8
  %v1969 = vpop.permute.xlu0 %1968
  %v1972 = vadd.f32 %v1952, %v1967
  %v1973 = vadd.f32 %v1953, %v1969
  %v1974 = vtanh.pop %v1972
  %v1975 = vtanh.pop %v1973
  %1978 = vrot.lane.b32.xlu0 %v1974, 8
  %v1979 = vpop.permute.xlu0 %1978
  %1980 = vrot.lane.b32.xlu0 %v1975, 8
  %v1981 = vpop.permute.xlu0 %1980
  %v1984 = vmul.f32 %v1926, %v1979
  %v1985 = vmul.f32 %v1941, %v1981
  %1988 = vrot.lane.b32.xlu0 %v1984, 32
  %v1989 = vpop.permute.xlu0 %1988
  %1990 = vrot.lane.b32.xlu0 %v1985, 32
  %v1991 = vpop.permute.xlu0 %1990
  %vm1994 = vcmask 982912
  %1995 = vst.msk [vmem:[%s2] sm:$0xff] %vm1994, %v1989
  %1996 = vst.msk [vmem:[%s2 + $0x8] sm:$0xff] %vm1994, %v1991
  %v1997 = vld [vmem:[%s0 + $0x18] sm:$0xff]
  %v1998 = vld [vmem:[%s0 + $0x38] sm:$0xff]
  %1999 = vrot.lane.b32.xlu0 %v1984, 48
  %v2000 = vpop.permute.xlu0 %1999
  %2001 = vrot.lane.b32.xlu0 %v1985, 48
  %v2002 = vpop.permute.xlu0 %2001
  %v2003 = vsel %vm14, %v2000, 0
  %v2005 = vsel %vm14, %v2002, 0
  %2007 = vmatpush.msra.mxu0 0.0
  %2008 = vmatpush.msra.mxu0 0.0
  %2009 = vmatpush.msra.mxu0 0.0
  %2010 = vmatpush.msra.mxu0 0.0
  %2011 = vmatpush.msra.mxu0 0.0
  %2012 = vmatpush.msra.mxu0 0.0
  %2013 = vmatpush.msra.mxu0 0.0
  %2014 = vmatpush.msra.mxu0 0.0
  %2015 = vmatpush.msra.mxu0 0.0
  %2016 = vmatpush.msra.mxu0 0.0
  %2017 = vmatpush.msra.mxu0 0.0
  %2018 = vmatpush.msra.mxu0 0.0
  %2019 = vmatpush.msra.mxu0 0.0
  %2020 = vmatpush.msra.mxu0 0.0
  %2021 = vmatpush.msra.mxu0 0.0
  %2022 = vmatpush.msra.mxu0 %v11
  %2023 = vmatmul.f32.gmra.mxu0 %v2003
  %v2024 = vpop.f32.mrf.mxu0
  %v2025 = vadd.f32 0.0, %v2024
  %2026 = vmatmul.f32.gmra.mxu0 %v2005
  %v2027 = vpop.f32.mrf.mxu0
  %v2028 = vadd.f32 0.0, %v2027
  %2029 = vdwg.mxu0
  %2032 = vrot.lane.b32.xlu0 %v2025, 96
  %v2033 = vpop.permute.xlu0 %2032
  %2034 = vrot.lane.b32.xlu0 %v2028, 96
  %v2035 = vpop.permute.xlu0 %2034
  %v2038 = vadd.f32 %v1997, %v2033
  %v2039 = vadd.f32 %v1998, %v2035
  %v2040 = vsub.f32 0.0, %v2038
  %v2041 = vsub.f32 0.0, %v2039
  %v2042 = vmul.f32 %v2040, 1.442695
  %v2043 = vpow.pop %v2042
  %v2044 = vmul.f32 %v2041, 1.442695
  %v2045 = vpow.pop %v2044
  %v2046 = vadd.f32 %v2043, 1.0
  %v2047 = vadd.f32 %v2045, 1.0
  %v2048 = vrcp.pop %v2046
  %v2049 = vmul.f32 %v2046, %v2048
  %v2050 = vsub.f32 1.0, %v2049
  %v2051 = vmul.f32 %v2048, %v2050
  %v2052 = vadd.f32 %v2048, %v2051
  %vm2053 = vweird.f32 %v2046
  %vm2054 = vweird.f32 %v2048
  %vm2055 = vmor %vm2053, %vm2054
  %v2056 = vsel %vm2055, %v2048, %v2052
  %v2057 = vand.u32 2147483647, %v2046
  %vm2058 = vcmp.eq.f32.partialorder %v2057, 8.507059e+37
  %v2059 = vand.u32 %v2046, 2147483648
  %v2060 = vor.u32 1.1754944e-38, %v2059
  %v2061 = vsel %vm2058, %v2060, %v2056
  %v2062 = vmul.f32 1.0, %v2061
  %v2063 = vrcp.pop %v2047
  %v2064 = vmul.f32 %v2047, %v2063
  %v2065 = vsub.f32 1.0, %v2064
  %v2066 = vmul.f32 %v2063, %v2065
  %v2067 = vadd.f32 %v2063, %v2066
  %vm2068 = vweird.f32 %v2047
  %vm2069 = vweird.f32 %v2063
  %vm2070 = vmor %vm2068, %vm2069
  %v2071 = vsel %vm2070, %v2063, %v2067
  %v2072 = vand.u32 2147483647, %v2047
  %vm2073 = vcmp.eq.f32.partialorder %v2072, 8.507059e+37
  %v2074 = vand.u32 %v2047, 2147483648
  %v2075 = vor.u32 1.1754944e-38, %v2074
  %v2076 = vsel %vm2073, %v2075, %v2071
  %v2077 = vmul.f32 1.0, %v2076
  %v2078 = vtanh.pop %v2038
  %v2079 = vtanh.pop %v2039
  %2082 = vrot.lane.b32.xlu0 %v1972, 32
  %v2083 = vpop.permute.xlu0 %2082
  %2084 = vrot.lane.b32.xlu0 %v1973, 32
  %v2085 = vpop.permute.xlu0 %2084
  %v2088 = vmul.f32 %v2062, %v2083
  %v2089 = vmul.f32 %v2077, %v2085
  %2092 = vrot.lane.b32.xlu0 %v2078, 104
  %v2093 = vpop.permute.xlu0 %2092
  %2094 = vrot.lane.b32.xlu0 %v2079, 104
  %v2095 = vpop.permute.xlu0 %2094
  %v2098 = vmul.f32 %v2062, %v2093
  %v2099 = vmul.f32 %v2077, %v2095
  %2102 = vrot.lane.b32.xlu0 %v2098, 8
  %v2103 = vpop.permute.xlu0 %2102
  %2104 = vrot.lane.b32.xlu0 %v2099, 8
  %v2105 = vpop.permute.xlu0 %2104
  %v2108 = vadd.f32 %v2088, %v2103
  %v2109 = vadd.f32 %v2089, %v2105
  %v2110 = vtanh.pop %v2108
  %v2111 = vtanh.pop %v2109
  %2114 = vrot.lane.b32.xlu0 %v2110, 8
  %v2115 = vpop.permute.xlu0 %2114
  %2116 = vrot.lane.b32.xlu0 %v2111, 8
  %v2117 = vpop.permute.xlu0 %2116
  %v2120 = vmul.f32 %v2062, %v2115
  %v2121 = vmul.f32 %v2077, %v2117
  %2124 = vrot.lane.b32.xlu0 %v2120, 8
  %v2125 = vpop.permute.xlu0 %2124
  %2126 = vrot.lane.b32.xlu0 %v2121, 8
  %v2127 = vpop.permute.xlu0 %2126
  %vm2130 = vcmask 1048512
  %2131 = vst.msk [vmem:[%s2] sm:$0xff] %vm2130, %v2125
  %2132 = vst.msk [vmem:[%s2 + $0x8] sm:$0xff] %vm2130, %v2127
  // Predicated region
  $region10: #{double_lstm_forward.2} parent=0 // pred_check
    _
  $region11: #{double_lstm_forward.2} parent=0 // pred_check_branch
    %2134 = sbr.rel (0) target = $region13
  $region12: #{double_lstm_forward.2} parent=0 // pred_region
    _
  $region13: #{double_lstm_forward.2} parent=0 // pred_fallthru
    _
  // Predicated region
  $region14: #{double_lstm_forward.2} parent=0 // pred_check
    _
  $region15: #{double_lstm_forward.2} parent=0 // pred_check_branch
    %2136 = sbr.rel (0) target = $region17
  $region16: #{double_lstm_forward.2} parent=0 // pred_region
    _
  $region17: #{double_lstm_forward.2} parent=0 // pred_fallthru
    _

</llo_original>
